<compile_context>
chip_gen: v6e
topology: v6e:2x2x1
jax: 0.10.0
libtpu: 0.0.40
codegen_flags: <defaults>
</compile_context>

<pallas_src>
import jax
import jax.numpy as jnp
from jax.experimental import pallas as pl
from jax.experimental.pallas import tpu as pltpu


def _round_up(x: int, m: int) -> int:
    return ((x + m - 1) // m) * m


def _pad_rows_to_8(tab):
    n = tab.shape[0]
    n_pad = _round_up(n, 8)
    if n_pad != n:
        tab = jnp.pad(tab, ((0, n_pad - n), (0, 0)))
    return tab


def _sales_kernel(uid_ref, iid_ref, utab_ref, itab_ref, out_ref):
    # uid_ref/iid_ref : (TB, 1) int32 id column for this batch tile
    # utab_ref        : (NU_pad, DU) user embedding table, resident in VMEM
    # itab_ref        : (NI_pad, DI) item embedding table, resident in VMEM
    # out_ref         : (TB, DU + DI) concatenated latent vectors
    uids = uid_ref[...]            # (TB, 1)
    iids = iid_ref[...]            # (TB, 1)
    utab = utab_ref[...]           # (NU_pad, DU)
    itab = itab_ref[...]           # (NI_pad, DI)

    tb = uids.shape[0]
    nu = utab.shape[0]
    ni = itab.shape[0]

    # One-hot gather on the MXU: one_hot(ids) @ table selects the rows exactly.
    u_onehot = (uids == jax.lax.broadcasted_iota(jnp.int32, (tb, nu), 1)).astype(utab.dtype)
    i_onehot = (iids == jax.lax.broadcasted_iota(jnp.int32, (tb, ni), 1)).astype(itab.dtype)

    u_rows = jnp.dot(u_onehot, utab,
                     precision=jax.lax.Precision.HIGHEST,
                     preferred_element_type=jnp.float32)   # (TB, DU)
    i_rows = jnp.dot(i_onehot, itab,
                     precision=jax.lax.Precision.HIGHEST,
                     preferred_element_type=jnp.float32)   # (TB, DI)

    # Single whole-block store of the lane-concatenated tile.
    out_ref[...] = jnp.concatenate([u_rows, i_rows], axis=-1).astype(out_ref.dtype)


def sales_nn_forward(user_table, item_table, user_input, item_input, *, block_rows=512):
    """Pallas implementation of SalesNN.forward.

    user_table: (num_users, user_dim) float
    item_table: (num_items, item_dim) float
    user_input / item_input: integer index arrays with identical shape
    Returns: squeeze(concat([user_table[user_input], item_table[item_input]], -1))
    """
    orig_shape = jnp.shape(user_input)
    uids = jnp.asarray(user_input, jnp.int32).reshape(-1)
    iids = jnp.asarray(item_input, jnp.int32).reshape(-1)
    assert uids.shape == iids.shape, "user_input and item_input must have the same shape"
    batch = uids.shape[0]

    num_users, du = user_table.shape
    num_items, di = item_table.shape
    out_dim = du + di
    out_dtype = jnp.result_type(user_table.dtype, item_table.dtype)

    # Safety: clamp ids so a bad id can never read past the table.
    uids = jnp.clip(uids, 0, num_users - 1)
    iids = jnp.clip(iids, 0, num_items - 1)

    # Batch tiling: TB rows per grid step (sublane-aligned, <= block_rows).
    block_rows = max(8, _round_up(block_rows, 8))
    tb = min(block_rows, _round_up(max(batch, 1), 8))
    b_pad = _round_up(max(batch, 1), tb)
    if b_pad != batch:
        uids = jnp.pad(uids, (0, b_pad - batch))   # padded ids are 0 (valid rows)
        iids = jnp.pad(iids, (0, b_pad - batch))
    uids2 = uids.reshape(b_pad, 1)
    iids2 = iids.reshape(b_pad, 1)

    # Pad table rows to a multiple of 8 for clean sublane layout; padded rows
    # are zero and never selected (ids are clamped to the original range).
    utab = _pad_rows_to_8(user_table.astype(out_dtype))
    itab = _pad_rows_to_8(item_table.astype(out_dtype))
    # TODO(synk): for very large tables (> ~32 MiB VMEM budget) switch to a
    # manual-DMA row-gather path instead of full VMEM residency.

    grid_spec = pltpu.PrefetchScalarGridSpec(
        num_scalar_prefetch=0,
        grid=(b_pad // tb,),
        in_specs=[
            pl.BlockSpec((tb, 1), lambda b: (b, 0)),               # user ids tile
            pl.BlockSpec((tb, 1), lambda b: (b, 0)),               # item ids tile
            pl.BlockSpec(memory_space=pltpu.MemorySpace.VMEM),     # user table (resident)
            pl.BlockSpec(memory_space=pltpu.MemorySpace.VMEM),     # item table (resident)
        ],
        out_specs=pl.BlockSpec((tb, out_dim), lambda b: (b, 0)),
    )

    out = pl.pallas_call(
        _sales_kernel,
        out_shape=jax.ShapeDtypeStruct((b_pad, out_dim), out_dtype),
        grid_spec=grid_spec,
        compiler_params=pltpu.CompilerParams(
            dimension_semantics=("parallel",),   # independent batch tiles (v7x megacore)
        ),
    )(uids2, iids2, utab, itab)

    if b_pad != batch:
        out = out[:batch]
    out = out.reshape(orig_shape + (out_dim,))
    # Match torch.squeeze: remove all size-1 dims.
    return jnp.squeeze(out)


if __name__ == "__main__":
    key = jax.random.PRNGKey(0)
    k_user, k_item, k_uid, k_iid = jax.random.split(key, 4)

    num_users, num_items = 16, 24
    user_dim, item_dim = 32, 64
    batch = 64

    # nn.Embedding default init ~ N(0, 1)
    user_table = jax.random.normal(k_user, (num_users, user_dim), dtype=jnp.float32)
    item_table = jax.random.normal(k_item, (num_items, item_dim), dtype=jnp.float32)

    user_input = jax.random.randint(k_uid, (batch,), 0, num_users, dtype=jnp.int32)
    item_input = jax.random.randint(k_iid, (batch,), 0, num_items, dtype=jnp.int32)

    # Use a small tile (32 rows) here so the test exercises multiple grid steps.
    out = sales_nn_forward(user_table, item_table, user_input, item_input, block_rows=32)
    out = jax.block_until_ready(out)

    # Pure-JAX reference for correctness.
    ref = jnp.squeeze(
        jnp.concatenate([user_table[user_input], item_table[item_input]], axis=-1)
    )
    assert out.shape == (batch, user_dim + item_dim), out.shape
    err = float(jnp.max(jnp.abs(out - ref)))
    assert jnp.allclose(out, ref, rtol=1e-5, atol=1e-5), f"mismatch vs reference, max err {err}"

    print("KERNEL_OK")
</pallas_src>

<mosaic_0001>
module attributes {stable_mosaic.version = 11 : i64} {
  func.func @_sales_kernel(%arg0: i32, %arg1: memref<32x1xi32, #tpu.memory_space<vmem>>, %arg2: memref<32x1xi32, #tpu.memory_space<vmem>>, %arg3: memref<16x32xf32, #tpu.memory_space<vmem>>, %arg4: memref<24x64xf32, #tpu.memory_space<vmem>>, %arg5: memref<32x96xf32, #tpu.memory_space<vmem>>) attributes {dimension_semantics = [#tpu.dimension_semantics<parallel>], iteration_bounds = array<i64: 2>, scalar_prefetch = 0 : i64, scratch_operands = 0 : i64, tpu.core_type = #tpu.core_type<tc>, window_params = [{transform_indices = @transform_0, window_bounds = array<i64: 32, 1>}, {transform_indices = @transform_1, window_bounds = array<i64: 32, 1>}, {pipeline_mode = #tpu.pipeline_mode<synchronous>, transform_indices = @transform_2, window_bounds = array<i64: 16, 32>}, {pipeline_mode = #tpu.pipeline_mode<synchronous>, transform_indices = @transform_3, window_bounds = array<i64: 24, 64>}, {transform_indices = @transform_4, window_bounds = array<i64: 32, 96>}]} {
    %c0 = arith.constant 0 : index
    %c0_0 = arith.constant 0 : index
    %0 = vector.load %arg1[%c0, %c0_0] : memref<32x1xi32, #tpu.memory_space<vmem>>, vector<32x1xi32>
    %c0_1 = arith.constant 0 : index
    %c0_2 = arith.constant 0 : index
    %1 = vector.load %arg2[%c0_1, %c0_2] : memref<32x1xi32, #tpu.memory_space<vmem>>, vector<32x1xi32>
    %c0_3 = arith.constant 0 : index
    %c0_4 = arith.constant 0 : index
    %2 = vector.load %arg3[%c0_3, %c0_4] : memref<16x32xf32, #tpu.memory_space<vmem>>, vector<16x32xf32>
    %c0_5 = arith.constant 0 : index
    %c0_6 = arith.constant 0 : index
    %3 = vector.load %arg4[%c0_5, %c0_6] : memref<24x64xf32, #tpu.memory_space<vmem>>, vector<24x64xf32>
    %4 = tpu.iota {dimensions = array<i32: 1>} : vector<32x16xi32>
    %5 = vector.broadcast %0 : vector<32x1xi32> to vector<32x16xi32>
    %6 = arith.cmpi eq, %5, %4 : vector<32x16xi32>
    %7 = arith.extui %6 : vector<32x16xi1> to vector<32x16xi32>
    %8 = arith.sitofp %7 : vector<32x16xi32> to vector<32x16xf32>
    %9 = tpu.iota {dimensions = array<i32: 1>} : vector<32x24xi32>
    %10 = vector.broadcast %1 : vector<32x1xi32> to vector<32x24xi32>
    %11 = arith.cmpi eq, %10, %9 : vector<32x24xi32>
    %12 = arith.extui %11 : vector<32x24xi1> to vector<32x24xi32>
    %13 = arith.sitofp %12 : vector<32x24xi32> to vector<32x24xf32>
    %cst = arith.constant dense<0.000000e+00> : vector<32x32xf32>
    %14 = tpu.matmul %8, %2, %cst {dimension_numbers = #tpu.dot_dimension_numbers<[1], [0], [0], [1], [0, 0, 1, 1], [], []>, precision = #tpu.contract_precision<fp32>} : vector<32x16xf32>, vector<16x32xf32>, vector<32x32xf32> -> vector<32x32xf32>
    %cst_7 = arith.constant dense<0.000000e+00> : vector<32x64xf32>
    %15 = tpu.matmul %13, %3, %cst_7 {dimension_numbers = #tpu.dot_dimension_numbers<[1], [0], [0], [1], [0, 0, 1, 1], [], []>, precision = #tpu.contract_precision<fp32>} : vector<32x24xf32>, vector<24x64xf32>, vector<32x64xf32> -> vector<32x64xf32>
    %16 = tpu.concatenate %14, %15 in 1 : vector<32x32xf32>, vector<32x64xf32> -> vector<32x96xf32>
    %c0_8 = arith.constant 0 : index
    %c0_9 = arith.constant 0 : index
    %17 = vector.load %arg5[%c0_8, %c0_9] : memref<32x96xf32, #tpu.memory_space<vmem>>, vector<32x96xf32>
    tpu.vector_store %arg5[%c0_8, %c0_9], %16 {strides = array<i32>} : memref<32x96xf32, #tpu.memory_space<vmem>>, vector<32x96xf32>,
    return
  }
  func.func @transform_0(%arg0: i32) -> (i32, i32) {
    %c0_i32 = arith.constant 0 : i32
    %c0_i32_0 = arith.constant 0 : i32
    return %arg0, %c0_i32 : i32, i32
  }
  func.func @transform_1(%arg0: i32) -> (i32, i32) {
    %c0_i32 = arith.constant 0 : i32
    %c0_i32_0 = arith.constant 0 : i32
    return %arg0, %c0_i32 : i32, i32
  }
  func.func @transform_2(%arg0: i32) -> (i32, i32) {
    %c0_i32 = arith.constant 0 : i32
    %c0_i32_0 = arith.constant 0 : i32
    %c0_i32_1 = arith.constant 0 : i32
    return %c0_i32, %c0_i32_0 : i32, i32
  }
  func.func @transform_3(%arg0: i32) -> (i32, i32) {
    %c0_i32 = arith.constant 0 : i32
    %c0_i32_0 = arith.constant 0 : i32
    %c0_i32_1 = arith.constant 0 : i32
    return %c0_i32, %c0_i32_0 : i32, i32
  }
  func.func @transform_4(%arg0: i32) -> (i32, i32) {
    %c0_i32 = arith.constant 0 : i32
    %c0_i32_0 = arith.constant 0 : i32
    return %arg0, %c0_i32 : i32, i32
  }
}

</mosaic_0001>

<llo_original>
// kernel: tpu_custom_call.1
$region0: #{tpu_custom_call.1}
  #allocation0 [shape = 'u32[]', space=smem, size = 0x4, offset = 0x4, fixed_abs, tag = 'smem constant byte address 0x4 - core index']
  #allocation1 [shape = 'u32[144,128]{1,0:T(1,128)}', space=vmem, size = 0x12000, scoped, tag = 'internal scratch']
  %s0 = inlined_call_operand.vmem [shape: s32[64,1], index: 0, kind: input, shape index: {}]
  %s1 = inlined_call_operand.vmem [shape: s32[64,1], index: 1, kind: input, shape index: {}]
  %s2 = inlined_call_operand.vmem [shape: f32[16,32], index: 2, kind: input, shape index: {}]
  %s3 = inlined_call_operand.vmem [shape: f32[24,64], index: 3, kind: input, shape index: {}]
  %s4 = inlined_call_operand.hbm [shape: f32[64,96], index: 4, kind: output, shape index: {}]
  %s5 = sld [smem:[#allocation0]]
  $region49: #{tpu_custom_call.1} parent=0
    _
  %s7 = ssub.s32 1, %s5
  %s8 = scalar_select 0, %s7, %s5
  $region1: #{tpu_custom_call.1} parent=0
    #allocation2 [shape = 'u8[32768]{0}', space=vmem, size = 0x8000, scoped, tag = 'output window, operand 0']
    #allocation3 [shape = 's32[2]{0}', space=sflag, size = 0x8, scoped, tag = 'scoped memory for tpu_custom_call.1']
    %9 = vsyncpa [#allocation3], 0
    %s10 = scalar_lea.sflag [#allocation3], 1
    %11 = vsyncpa %s10, 0
    loop: start=0, step=1, limit=4
    $region2: #{tpu_custom_call.1} parent=1 // loop_pre_header
      _
    $region3: #{tpu_custom_call.1} parent=1 // loop_header
      %s13 = sphi 0, %s17
      %p14 = scmp.ge.s32.totalorder %s13, 4
      %s23 = sphi 0, %s25
      %s26 = sphi 0, %s23
      %s27 = sphi 0, %s26
      %s43 = sphi 0, %s27
      %s49 = sphi 0, %s51
      %s52 = sphi 0, %s49
      %s53 = sphi 0, %s52
      %s69 = sphi 0, %s53
      %s73 = sphi 0, %s73
      %s75 = sphi 0, %s73
      %s76 = sphi 0, %s75
      %s90 = sphi 0, %s76
      %s94 = sphi 0, %s94
      %s96 = sphi 0, %s94
      %s97 = sphi 0, %s96
      %s111 = sphi 0, %s97
      %s117 = sphi 0, %s119
      %s120 = sphi 0, %s117
      %s121 = sphi 0, %s120
      %s137 = sphi 0, %s121
    $region4: #{tpu_custom_call.1} parent=1 // loop_header_branch
      %16 = sbr.rel (%p14) target = $region8
    $region5: #{tpu_custom_call.1} parent=1 // loop_body
      %s18 = ssub.s32 %s13, 1
      %s19 = ssub.s32 %s13, 2
      %s20 = sadd.s32 %s13, 1
      %s21 = ssub.s32 %s13, %s20
      %p22 = scmp.eq.s32.totalorder %s21, 0
      %s24 = sadd.s32 %s23, 1
      %s25 = scalar_select %p22, %s23, %s24
      %p28 = pneg %p22
      %p29 = scmp.eq.s32.totalorder %s13, 1
      %p30 = por %p28, %p29
      %p31 = scmp.ne.s32.totalorder %s23, %s26
      %p32 = scmp.eq.s32.totalorder %s13, 0
      %p33 = por %p31, %p32
      %p34 = scmp.ne.s32.totalorder %s23, %s26
      %p35 = scmp.eq.s32.totalorder %s18, 1
      %p36 = por %p34, %p35
      %p37 = scmp.ne.s32.totalorder %s26, %s27
      %p38 = scmp.eq.s32.totalorder %s18, 0
      %p39 = por %p37, %p38
      %p40 = scmp.ne.s32.totalorder %s26, %s27
      %p41 = scmp.eq.s32.totalorder %s19, 1
      %p42 = por %p40, %p41
      %p44 = scmp.ne.s32.totalorder %s27, %s43
      %p45 = scmp.eq.s32.totalorder %s19, 0
      %p46 = por %p44, %p45
      %s47 = ssub.s32 %s13, %s20
      %p48 = scmp.eq.s32.totalorder %s47, 0
      %s50 = sadd.s32 %s49, 1
      %s51 = scalar_select %p48, %s49, %s50
      %p54 = pneg %p48
      %p55 = scmp.eq.s32.totalorder %s13, 1
      %p56 = por %p54, %p55
      %p57 = scmp.ne.s32.totalorder %s49, %s52
      %p58 = scmp.eq.s32.totalorder %s13, 0
      %p59 = por %p57, %p58
      %p60 = scmp.ne.s32.totalorder %s49, %s52
      %p61 = scmp.eq.s32.totalorder %s18, 1
      %p62 = por %p60, %p61
      %p63 = scmp.ne.s32.totalorder %s52, %s53
      %p64 = scmp.eq.s32.totalorder %s18, 0
      %p65 = por %p63, %p64
      %p66 = scmp.ne.s32.totalorder %s52, %s53
      %p67 = scmp.eq.s32.totalorder %s19, 1
      %p68 = por %p66, %p67
      %p70 = scmp.ne.s32.totalorder %s53, %s69
      %p71 = scmp.eq.s32.totalorder %s19, 0
      %p72 = por %p70, %p71
      %s74 = sadd.s32 %s73, 1
      %p77 = scmp.eq.s32.totalorder %s13, 1
      %p78 = scmp.ne.s32.totalorder %s73, %s75
      %p79 = scmp.eq.s32.totalorder %s13, 0
      %p80 = por %p78, %p79
      %p81 = scmp.ne.s32.totalorder %s73, %s75
      %p82 = scmp.eq.s32.totalorder %s18, 1
      %p83 = por %p81, %p82
      %p84 = scmp.ne.s32.totalorder %s75, %s76
      %p85 = scmp.eq.s32.totalorder %s18, 0
      %p86 = por %p84, %p85
      %p87 = scmp.ne.s32.totalorder %s75, %s76
      %p88 = scmp.eq.s32.totalorder %s19, 1
      %p89 = por %p87, %p88
      %p91 = scmp.ne.s32.totalorder %s76, %s90
      %p92 = scmp.eq.s32.totalorder %s19, 0
      %p93 = por %p91, %p92
      %s95 = sadd.s32 %s94, 1
      %p98 = scmp.eq.s32.totalorder %s13, 1
      %p99 = scmp.ne.s32.totalorder %s94, %s96
      %p100 = scmp.eq.s32.totalorder %s13, 0
      %p101 = por %p99, %p100
      %p102 = scmp.ne.s32.totalorder %s94, %s96
      %p103 = scmp.eq.s32.totalorder %s18, 1
      %p104 = por %p102, %p103
      %p105 = scmp.ne.s32.totalorder %s96, %s97
      %p106 = scmp.eq.s32.totalorder %s18, 0
      %p107 = por %p105, %p106
      %p108 = scmp.ne.s32.totalorder %s96, %s97
      %p109 = scmp.eq.s32.totalorder %s19, 1
      %p110 = por %p108, %p109
      %p112 = scmp.ne.s32.totalorder %s97, %s111
      %p113 = scmp.eq.s32.totalorder %s19, 0
      %p114 = por %p112, %p113
      %s115 = ssub.s32 %s13, %s20
      %p116 = scmp.eq.s32.totalorder %s115, 0
      %s118 = sadd.s32 %s117, 1
      %s119 = scalar_select %p116, %s117, %s118
      %p122 = pneg %p116
      %p123 = scmp.eq.s32.totalorder %s13, 1
      %p124 = por %p122, %p123
      %p125 = scmp.ne.s32.totalorder %s117, %s120
      %p126 = scmp.eq.s32.totalorder %s13, 0
      %p127 = por %p125, %p126
      %p128 = scmp.ne.s32.totalorder %s117, %s120
      %p129 = scmp.eq.s32.totalorder %s18, 1
      %p130 = por %p128, %p129
      %p131 = scmp.ne.s32.totalorder %s120, %s121
      %p132 = scmp.eq.s32.totalorder %s18, 0
      %p133 = por %p131, %p132
      %p134 = scmp.ne.s32.totalorder %s120, %s121
      %p135 = scmp.eq.s32.totalorder %s19, 1
      %p136 = por %p134, %p135
      %p138 = scmp.ne.s32.totalorder %s121, %s137
      %p139 = scmp.eq.s32.totalorder %s19, 0
      %p140 = por %p138, %p139
      %p141 = scmp.le.s32.totalorder 1, %s13
      %p142 = scmp.lt.s32.totalorder %s13, 3
      %p143 = pnand %p141, %p142
      %p144 = pneg %p143
      // Predicated region
      $region9: #{tpu_custom_call.1} parent=5 // pred_check
        _
      $region10: #{tpu_custom_call.1} parent=5 // pred_check_branch
        %146 = sbr.rel (%p143) target = $region12
      $region11: #{tpu_custom_call.1} parent=5 // pred_region
        %s147 = ssub.s32 %s13, 1
        // Predicated region
        $region13: #{tpu_custom_call.1} parent=11 // pred_check
          %p148 = pneg %p86
        $region14: #{tpu_custom_call.1} parent=11 // pred_check_branch
          %150 = sbr.rel (%p148) target = $region16
        $region15: #{tpu_custom_call.1} parent=11 // pred_region
          _
        $region16: #{tpu_custom_call.1} parent=11 // pred_fallthru
          _
        // Predicated region
        $region17: #{tpu_custom_call.1} parent=11 // pred_check
          %p151 = pneg %p107
        $region18: #{tpu_custom_call.1} parent=11 // pred_check_branch
          %153 = sbr.rel (%p151) target = $region20
        $region19: #{tpu_custom_call.1} parent=11 // pred_region
          _
        $region20: #{tpu_custom_call.1} parent=11 // pred_fallthru
          _
      $region12: #{tpu_custom_call.1} parent=5 // pred_fallthru
        _
      %p154 = scmp.lt.s32.totalorder %s13, 2
      // Predicated region
      $region21: #{tpu_custom_call.1} parent=5 // pred_check
        %p155 = pneg %p154
      $region22: #{tpu_custom_call.1} parent=5 // pred_check_branch
        %157 = sbr.rel (%p155) target = $region24
      $region23: #{tpu_custom_call.1} parent=5 // pred_region
        // Predicated region
        $region25: #{tpu_custom_call.1} parent=23 // pred_check
          %p158 = pneg %p33
        $region26: #{tpu_custom_call.1} parent=23 // pred_check_branch
          %160 = sbr.rel (%p158) target = $region28
        $region27: #{tpu_custom_call.1} parent=23 // pred_region
          %s161 = smul.u32 4, %s13
          %p162 = scmp.lt.s32.totalorder %s161, 7
          %s163 = scalar_select %p162, %s161, 7
          %s164 = smul.addr %s163, 8
          %s165 = scalar_lea.vmem %s0, %s164
          %s166 = smul.u32 4, %s13
        $region28: #{tpu_custom_call.1} parent=23 // pred_fallthru
          _
        // Predicated region
        $region29: #{tpu_custom_call.1} parent=23 // pred_check
          %p167 = pneg %p59
        $region30: #{tpu_custom_call.1} parent=23 // pred_check_branch
          %169 = sbr.rel (%p167) target = $region32
        $region31: #{tpu_custom_call.1} parent=23 // pred_region
          %s170 = smul.u32 4, %s13
          %p171 = scmp.lt.s32.totalorder %s170, 7
          %s172 = scalar_select %p171, %s170, 7
          %s173 = smul.addr %s172, 8
          %s174 = scalar_lea.vmem %s1, %s173
          %s175 = smul.u32 4, %s13
        $region32: #{tpu_custom_call.1} parent=23 // pred_fallthru
          _
      $region24: #{tpu_custom_call.1} parent=5 // pred_fallthru
        _
      %p176 = scmp.le.s32.totalorder 1, %s13
      %p177 = scmp.lt.s32.totalorder %s13, 3
      %p178 = pnand %p176, %p177
      %p179 = pneg %p178
      // Predicated region
      $region33: #{tpu_custom_call.1} parent=5 // pred_check
        _
      $region34: #{tpu_custom_call.1} parent=5 // pred_check_branch
        %181 = sbr.rel (%p178) target = $region36
      $region35: #{tpu_custom_call.1} parent=5 // pred_region
        %s182 = ssub.s32 %s13, 1
        %s183 = smul.u32 4, %s18
        %p184 = scmp.lt.s32.totalorder %s183, 7
        %s185 = scalar_select %p184, %s183, 7
        %s186 = smul.addr %s185, 8
        %s187 = scalar_lea.vmem %s0, %s186
        %p188 = pneg %p39
        %p189 = pneg %p36
        %s190 = smul.u32 4, %s18
        %p191 = scmp.lt.s32.totalorder %s190, 7
        %s192 = scalar_select %p191, %s190, 7
        %s193 = smul.addr %s192, 8
        %s194 = scalar_lea.vmem %s1, %s193
        %p195 = pneg %p65
        %p196 = pneg %p62
        %p197 = pneg %p86
        %p198 = pneg %p83
        %p199 = pneg %p107
        %p200 = pneg %p104
        %p201 = pneg %p133
        %p202 = pneg %p130
        %s203 = sand.u32 %s120, 1
        %s204 = scalar_lea.sflag [#allocation3], %s203
        %s205 = sand.u32 %s120, 1
        %s206 = smul.addr %s205, 32
        %s207 = scalar_lea.vmem [#allocation2], %s206
        %s208 = smul.u32 4, %s18
        %p209 = scmp.lt.s32.totalorder %s208, 7
        %s210 = scalar_select %p209, %s208, 7
        %s211 = smul.addr %s210, 8
        %s212 = scalar_lea.vmem %s0, %s211
        %s213 = smul.u32 4, %s18
        %s214 = smul.u32 4, %s18
        %p215 = scmp.lt.s32.totalorder %s214, 7
        %s216 = scalar_select %p215, %s214, 7
        %s217 = smul.addr %s216, 8
        %s218 = scalar_lea.vmem %s1, %s217
        %s219 = smul.u32 4, %s18
        %s220 = smul.u32 4, %s18
        %v221 = vld [vmem:[%s212] sm:$0xff]
        %v222 = vld [vmem:[%s212 + $0x8] sm:$0xff]
        %v223 = vld [vmem:[%s212 + $0x10] sm:$0xff]
        %v224 = vld [vmem:[%s212 + $0x18] sm:$0xff]
        %v225 = vld [vmem:[%s218] sm:$0xff]
        %v226 = vld [vmem:[%s218 + $0x8] sm:$0xff]
        %v227 = vld [vmem:[%s218 + $0x10] sm:$0xff]
        %v228 = vld [vmem:[%s218 + $0x18] sm:$0xff]
        %v229 = vld [vmem:[%s2] sm:$0xff]
        %v230 = vld [vmem:[%s2 + $0x8] sm:$0xff]
        %v231 = vld [vmem:[%s3] sm:$0xff]
        %v232 = vld [vmem:[%s3 + $0x8] sm:$0xff]
        %v233 = vld [vmem:[%s3 + $0x10] sm:$0xff]
        %v234 = vlaneseq
        %v235 = vand.u32 %v234, 127
        %236 = vset.pattern.permute.xlu0 0
        %237 = vperm.xlu0 %236, %v221
        %v238 = vpop.permute.xlu0 %237
        %239 = vset.pattern.permute.xlu0 0
        %240 = vperm.xlu0 %239, %v222
        %v241 = vpop.permute.xlu0 %240
        %242 = vset.pattern.permute.xlu0 0
        %243 = vperm.xlu0 %242, %v223
        %v244 = vpop.permute.xlu0 %243
        %245 = vset.pattern.permute.xlu0 0
        %246 = vperm.xlu0 %245, %v224
        %v247 = vpop.permute.xlu0 %246
        %vm248 = vcmp.eq.s32.totalorder %v238, %v235
        %vm249 = vcmp.eq.s32.totalorder %v241, %v235
        %vm250 = vcmp.eq.s32.totalorder %v244, %v235
        %vm251 = vcmp.eq.s32.totalorder %v247, %v235
        %v252 = vsel %vm248, 1, 0
        %v253 = vsel %vm249, 1, 0
        %v254 = vsel %vm250, 1, 0
        %v255 = vsel %vm251, 1, 0
        %v256 = vcvt.s32.f32 %v252
        %v257 = vcvt.s32.f32 %v253
        %v258 = vcvt.s32.f32 %v254
        %v259 = vcvt.s32.f32 %v255
        %260 = vset.pattern.permute.xlu0 0
        %261 = vperm.xlu0 %260, %v225
        %v262 = vpop.permute.xlu0 %261
        %263 = vset.pattern.permute.xlu0 0
        %264 = vperm.xlu0 %263, %v226
        %v265 = vpop.permute.xlu0 %264
        %266 = vset.pattern.permute.xlu0 0
        %267 = vperm.xlu0 %266, %v227
        %v268 = vpop.permute.xlu0 %267
        %269 = vset.pattern.permute.xlu0 0
        %270 = vperm.xlu0 %269, %v228
        %v271 = vpop.permute.xlu0 %270
        %vm272 = vcmp.eq.s32.totalorder %v262, %v235
        %vm273 = vcmp.eq.s32.totalorder %v265, %v235
        %vm274 = vcmp.eq.s32.totalorder %v268, %v235
        %vm275 = vcmp.eq.s32.totalorder %v271, %v235
        %v276 = vsel %vm272, 1, 0
        %v277 = vsel %vm273, 1, 0
        %v278 = vsel %vm274, 1, 0
        %v279 = vsel %vm275, 1, 0
        %v280 = vcvt.s32.f32 %v276
        %v281 = vcvt.s32.f32 %v277
        %v282 = vcvt.s32.f32 %v278
        %v283 = vcvt.s32.f32 %v279
        %vm284 = vcmask 130048
        %v286 = vsel %vm284, %v256, 0
        %v289 = vsel %vm284, %v257, 0
        %v292 = vsel %vm284, %v258, 0
        %v295 = vsel %vm284, %v259, 0
        %297 = vmatprep.subr.mxu0 0.0
        %298 = vmatpush1.msra.mxu0 0.0
        %299 = vmatprep.subr.mxu0 0.0
        %300 = vmatpush1.msra.mxu0 0.0
        %301 = vmatprep.subr.mxu0 0.0
        %302 = vmatpush1.msra.mxu0 0.0
        %303 = vmatprep.subr.mxu0 0.0
        %304 = vmatpush1.msra.mxu0 0.0
        %305 = vmatprep.subr.mxu0 0.0
        %306 = vmatpush1.msra.mxu0 0.0
        %307 = vmatprep.subr.mxu0 0.0
        %308 = vmatpush1.msra.mxu0 0.0
        %309 = vmatprep.subr.mxu0 0.0
        %310 = vmatpush1.msra.mxu0 0.0
        %311 = vmatprep.subr.mxu0 0.0
        %312 = vmatpush1.msra.mxu0 0.0
        %313 = vmatprep.subr.mxu0 0.0
        %314 = vmatpush1.msra.mxu0 0.0
        %315 = vmatprep.subr.mxu0 0.0
        %316 = vmatpush1.msra.mxu0 0.0
        %317 = vmatprep.subr.mxu0 0.0
        %318 = vmatpush1.msra.mxu0 0.0
        %319 = vmatprep.subr.mxu0 0.0
        %320 = vmatpush1.msra.mxu0 0.0
        %321 = vmatprep.subr.mxu0 0.0
        %322 = vmatpush1.msra.mxu0 0.0
        %323 = vmatprep.subr.mxu0 0.0
        %324 = vmatpush1.msra.mxu0 0.0
        %325 = vmatprep.subr.mxu0 0.0
        %v326 = vand.u32 %v230, 4294901760
        %327 = vmatpush1.msra.mxu0 %v326
        %328 = vmatprep.subr.mxu0 0.0
        %v329 = vand.u32 %v229, 4294901760
        %330 = vmatpush1.msra.mxu0 %v329
        %331 = vmatprep.subr.mxu0 0.0
        %332 = vmatpush2.msra.mxu0 0.0
        %333 = vmatprep.subr.mxu0 0.0
        %334 = vmatpush2.msra.mxu0 0.0
        %335 = vmatprep.subr.mxu0 0.0
        %336 = vmatpush2.msra.mxu0 0.0
        %337 = vmatprep.subr.mxu0 0.0
        %338 = vmatpush2.msra.mxu0 0.0
        %339 = vmatprep.subr.mxu0 0.0
        %340 = vmatpush2.msra.mxu0 0.0
        %341 = vmatprep.subr.mxu0 0.0
        %342 = vmatpush2.msra.mxu0 0.0
        %343 = vmatprep.subr.mxu0 0.0
        %344 = vmatpush2.msra.mxu0 0.0
        %345 = vmatprep.subr.mxu0 0.0
        %346 = vmatpush2.msra.mxu0 0.0
        %347 = vmatprep.subr.mxu0 0.0
        %348 = vmatpush2.msra.mxu0 0.0
        %349 = vmatprep.subr.mxu0 0.0
        %350 = vmatpush2.msra.mxu0 0.0
        %351 = vmatprep.subr.mxu0 0.0
        %352 = vmatpush2.msra.mxu0 0.0
        %353 = vmatprep.subr.mxu0 0.0
        %354 = vmatpush2.msra.mxu0 0.0
        %355 = vmatprep.subr.mxu0 0.0
        %356 = vmatpush2.msra.mxu0 0.0
        %357 = vmatprep.subr.mxu0 0.0
        %358 = vmatpush2.msra.mxu0 0.0
        %359 = vmatprep.subr.mxu0 0.0
        %360 = vmatpush2.msra.mxu0 0.0
        %361 = vmatprep.subr.mxu0 0.0
        %362 = vmatpush2.msra.mxu0 0.0
        %363 = vmatprep.mubr.f32.mxu0 0.0
        %v364 = vand.u32 %v286, 4294901760
        %v365 = vsub.f32 %v286, %v364
        %v366 = vand.u32 %v365, 4294901760
        %v367 = vsub.f32 %v365, %v366
        %v368 = vand.u32 %v367, 4294901760
        %369 = vmatmul.mubr.f32.gmra.mxu0 %v368
        %v370 = vpop.f32.mrf.mxu0
        %v371 = vadd.f32 0.0, %v370
        %v372 = vpop.f32.mrf.mxu0
        %373 = vmatprep.mubr.f32.mxu0 0.0
        %v374 = vand.u32 %v289, 4294901760
        %v375 = vsub.f32 %v289, %v374
        %v376 = vand.u32 %v375, 4294901760
        %v377 = vsub.f32 %v375, %v376
        %v378 = vand.u32 %v377, 4294901760
        %379 = vmatmul.mubr.f32.gmra.mxu0 %v378
        %v380 = vpop.f32.mrf.mxu0
        %v381 = vadd.f32 0.0, %v380
        %v382 = vpop.f32.mrf.mxu0
        %383 = vmatprep.mubr.f32.mxu0 0.0
        %v384 = vand.u32 %v292, 4294901760
        %v385 = vsub.f32 %v292, %v384
        %v386 = vand.u32 %v385, 4294901760
        %v387 = vsub.f32 %v385, %v386
        %v388 = vand.u32 %v387, 4294901760
        %389 = vmatmul.mubr.f32.gmra.mxu0 %v388
        %v390 = vpop.f32.mrf.mxu0
        %v391 = vadd.f32 0.0, %v390
        %v392 = vpop.f32.mrf.mxu0
        %393 = vmatprep.mubr.f32.mxu0 0.0
        %v394 = vand.u32 %v295, 4294901760
        %v395 = vsub.f32 %v295, %v394
        %v396 = vand.u32 %v395, 4294901760
        %v397 = vsub.f32 %v395, %v396
        %v398 = vand.u32 %v397, 4294901760
        %399 = vmatmul.mubr.f32.gmra.mxu0 %v398
        %v400 = vpop.f32.mrf.mxu0
        %v401 = vadd.f32 0.0, %v400
        %v402 = vpop.f32.mrf.mxu0
        %403 = vdwg.mxu0
        %404 = vmatprep.subr.mxu0 0.0
        %405 = vmatpush1.msra.mxu0 0.0
        %406 = vmatprep.subr.mxu0 0.0
        %407 = vmatpush1.msra.mxu0 0.0
        %408 = vmatprep.subr.mxu0 0.0
        %409 = vmatpush1.msra.mxu0 0.0
        %410 = vmatprep.subr.mxu0 0.0
        %411 = vmatpush1.msra.mxu0 0.0
        %412 = vmatprep.subr.mxu0 0.0
        %413 = vmatpush1.msra.mxu0 0.0
        %414 = vmatprep.subr.mxu0 0.0
        %415 = vmatpush1.msra.mxu0 0.0
        %416 = vmatprep.subr.mxu0 0.0
        %417 = vmatpush1.msra.mxu0 0.0
        %418 = vmatprep.subr.mxu0 0.0
        %419 = vmatpush1.msra.mxu0 0.0
        %420 = vmatprep.subr.mxu0 0.0
        %421 = vmatpush1.msra.mxu0 0.0
        %422 = vmatprep.subr.mxu0 0.0
        %423 = vmatpush1.msra.mxu0 0.0
        %424 = vmatprep.subr.mxu0 0.0
        %425 = vmatpush1.msra.mxu0 0.0
        %426 = vmatprep.subr.mxu0 0.0
        %427 = vmatpush1.msra.mxu0 0.0
        %428 = vmatprep.subr.mxu0 0.0
        %429 = vmatpush1.msra.mxu0 0.0
        %430 = vmatprep.subr.mxu0 0.0
        %431 = vmatpush1.msra.mxu0 0.0
        %432 = vmatprep.subr.mxu0 0.0
        %v433 = vand.u32 %v230, 4294901760
        %v434 = vsub.f32 %v230, %v433
        %v435 = vand.u32 %v434, 4294901760
        %v436 = vsub.f32 %v434, %v435
        %v437 = vand.u32 %v436, 4294901760
        %438 = vmatpush1.msra.mxu0 %v437
        %439 = vmatprep.subr.mxu0 0.0
        %v440 = vand.u32 %v229, 4294901760
        %v441 = vsub.f32 %v229, %v440
        %v442 = vand.u32 %v441, 4294901760
        %v443 = vsub.f32 %v441, %v442
        %v444 = vand.u32 %v443, 4294901760
        %445 = vmatpush1.msra.mxu0 %v444
        %446 = vmatprep.subr.mxu0 0.0
        %447 = vmatpush2.msra.mxu0 0.0
        %448 = vmatprep.subr.mxu0 0.0
        %449 = vmatpush2.msra.mxu0 0.0
        %450 = vmatprep.subr.mxu0 0.0
        %451 = vmatpush2.msra.mxu0 0.0
        %452 = vmatprep.subr.mxu0 0.0
        %453 = vmatpush2.msra.mxu0 0.0
        %454 = vmatprep.subr.mxu0 0.0
        %455 = vmatpush2.msra.mxu0 0.0
        %456 = vmatprep.subr.mxu0 0.0
        %457 = vmatpush2.msra.mxu0 0.0
        %458 = vmatprep.subr.mxu0 0.0
        %459 = vmatpush2.msra.mxu0 0.0
        %460 = vmatprep.subr.mxu0 0.0
        %461 = vmatpush2.msra.mxu0 0.0
        %462 = vmatprep.subr.mxu0 0.0
        %463 = vmatpush2.msra.mxu0 0.0
        %464 = vmatprep.subr.mxu0 0.0
        %465 = vmatpush2.msra.mxu0 0.0
        %466 = vmatprep.subr.mxu0 0.0
        %467 = vmatpush2.msra.mxu0 0.0
        %468 = vmatprep.subr.mxu0 0.0
        %469 = vmatpush2.msra.mxu0 0.0
        %470 = vmatprep.subr.mxu0 0.0
        %471 = vmatpush2.msra.mxu0 0.0
        %472 = vmatprep.subr.mxu0 0.0
        %473 = vmatpush2.msra.mxu0 0.0
        %474 = vmatprep.subr.mxu0 0.0
        %475 = vmatpush2.msra.mxu0 0.0
        %476 = vmatprep.subr.mxu0 0.0
        %477 = vmatpush2.msra.mxu0 0.0
        %478 = vmatprep.mubr.f32.mxu0 0.0
        %v479 = vand.u32 %v286, 4294901760
        %480 = vmatmul.mubr.f32.gmra.mxu0 %v479
        %v481 = vpop.f32.mrf.mxu0
        %v482 = vadd.f32 %v371, %v481
        %v483 = vpop.f32.mrf.mxu0
        %484 = vmatprep.mubr.f32.mxu0 0.0
        %v485 = vand.u32 %v289, 4294901760
        %486 = vmatmul.mubr.f32.gmra.mxu0 %v485
        %v487 = vpop.f32.mrf.mxu0
        %v488 = vadd.f32 %v381, %v487
        %v489 = vpop.f32.mrf.mxu0
        %490 = vmatprep.mubr.f32.mxu0 0.0
        %v491 = vand.u32 %v292, 4294901760
        %492 = vmatmul.mubr.f32.gmra.mxu0 %v491
        %v493 = vpop.f32.mrf.mxu0
        %v494 = vadd.f32 %v391, %v493
        %v495 = vpop.f32.mrf.mxu0
        %496 = vmatprep.mubr.f32.mxu0 0.0
        %v497 = vand.u32 %v295, 4294901760
        %498 = vmatmul.mubr.f32.gmra.mxu0 %v497
        %v499 = vpop.f32.mrf.mxu0
        %v500 = vadd.f32 %v401, %v499
        %v501 = vpop.f32.mrf.mxu0
        %502 = vdwg.mxu0
        %503 = vmatprep.subr.mxu0 0.0
        %504 = vmatpush1.msra.mxu0 0.0
        %505 = vmatprep.subr.mxu0 0.0
        %506 = vmatpush1.msra.mxu0 0.0
        %507 = vmatprep.subr.mxu0 0.0
        %508 = vmatpush1.msra.mxu0 0.0
        %509 = vmatprep.subr.mxu0 0.0
        %510 = vmatpush1.msra.mxu0 0.0
        %511 = vmatprep.subr.mxu0 0.0
        %512 = vmatpush1.msra.mxu0 0.0
        %513 = vmatprep.subr.mxu0 0.0
        %514 = vmatpush1.msra.mxu0 0.0
        %515 = vmatprep.subr.mxu0 0.0
        %516 = vmatpush1.msra.mxu0 0.0
        %517 = vmatprep.subr.mxu0 0.0
        %518 = vmatpush1.msra.mxu0 0.0
        %519 = vmatprep.subr.mxu0 0.0
        %520 = vmatpush1.msra.mxu0 0.0
        %521 = vmatprep.subr.mxu0 0.0
        %522 = vmatpush1.msra.mxu0 0.0
        %523 = vmatprep.subr.mxu0 0.0
        %524 = vmatpush1.msra.mxu0 0.0
        %525 = vmatprep.subr.mxu0 0.0
        %526 = vmatpush1.msra.mxu0 0.0
        %527 = vmatprep.subr.mxu0 0.0
        %528 = vmatpush1.msra.mxu0 0.0
        %529 = vmatprep.subr.mxu0 0.0
        %530 = vmatpush1.msra.mxu0 0.0
        %531 = vmatprep.subr.mxu0 0.0
        %v532 = vand.u32 %v230, 4294901760
        %v533 = vsub.f32 %v230, %v532
        %534 = vmatpush1.msra.mxu0 %v533
        %535 = vmatprep.subr.mxu0 0.0
        %v536 = vand.u32 %v229, 4294901760
        %v537 = vsub.f32 %v229, %v536
        %538 = vmatpush1.msra.mxu0 %v537
        %539 = vmatprep.subr.mxu0 0.0
        %540 = vmatpush2.msra.mxu0 0.0
        %541 = vmatprep.subr.mxu0 0.0
        %542 = vmatpush2.msra.mxu0 0.0
        %543 = vmatprep.subr.mxu0 0.0
        %544 = vmatpush2.msra.mxu0 0.0
        %545 = vmatprep.subr.mxu0 0.0
        %546 = vmatpush2.msra.mxu0 0.0
        %547 = vmatprep.subr.mxu0 0.0
        %548 = vmatpush2.msra.mxu0 0.0
        %549 = vmatprep.subr.mxu0 0.0
        %550 = vmatpush2.msra.mxu0 0.0
        %551 = vmatprep.subr.mxu0 0.0
        %552 = vmatpush2.msra.mxu0 0.0
        %553 = vmatprep.subr.mxu0 0.0
        %554 = vmatpush2.msra.mxu0 0.0
        %555 = vmatprep.subr.mxu0 0.0
        %556 = vmatpush2.msra.mxu0 0.0
        %557 = vmatprep.subr.mxu0 0.0
        %558 = vmatpush2.msra.mxu0 0.0
        %559 = vmatprep.subr.mxu0 0.0
        %560 = vmatpush2.msra.mxu0 0.0
        %561 = vmatprep.subr.mxu0 0.0
        %562 = vmatpush2.msra.mxu0 0.0
        %563 = vmatprep.subr.mxu0 0.0
        %564 = vmatpush2.msra.mxu0 0.0
        %565 = vmatprep.subr.mxu0 0.0
        %566 = vmatpush2.msra.mxu0 0.0
        %567 = vmatprep.subr.mxu0 0.0
        %568 = vmatpush2.msra.mxu0 0.0
        %569 = vmatprep.subr.mxu0 0.0
        %570 = vmatpush2.msra.mxu0 0.0
        %571 = vmatprep.mubr.f32.mxu0 0.0
        %v572 = vand.u32 %v286, 4294901760
        %v573 = vsub.f32 %v286, %v572
        %574 = vmatmul.mubr.f32.gmra.mxu0 %v573
        %v575 = vpop.f32.mrf.mxu0
        %v576 = vadd.f32 %v482, %v575
        %v577 = vpop.f32.mrf.mxu0
        %578 = vmatprep.mubr.f32.mxu0 0.0
        %v579 = vand.u32 %v289, 4294901760
        %v580 = vsub.f32 %v289, %v579
        %581 = vmatmul.mubr.f32.gmra.mxu0 %v580
        %v582 = vpop.f32.mrf.mxu0
        %v583 = vadd.f32 %v488, %v582
        %v584 = vpop.f32.mrf.mxu0
        %585 = vmatprep.mubr.f32.mxu0 0.0
        %v586 = vand.u32 %v292, 4294901760
        %v587 = vsub.f32 %v292, %v586
        %588 = vmatmul.mubr.f32.gmra.mxu0 %v587
        %v589 = vpop.f32.mrf.mxu0
        %v590 = vadd.f32 %v494, %v589
        %v591 = vpop.f32.mrf.mxu0
        %592 = vmatprep.mubr.f32.mxu0 0.0
        %v593 = vand.u32 %v295, 4294901760
        %v594 = vsub.f32 %v295, %v593
        %595 = vmatmul.mubr.f32.gmra.mxu0 %v594
        %v596 = vpop.f32.mrf.mxu0
        %v597 = vadd.f32 %v500, %v596
        %v598 = vpop.f32.mrf.mxu0
        %599 = vdwg.mxu0
        %600 = vmatprep.subr.mxu0 0.0
        %601 = vmatpush1.msra.mxu0 0.0
        %602 = vmatprep.subr.mxu0 0.0
        %603 = vmatpush1.msra.mxu0 0.0
        %604 = vmatprep.subr.mxu0 0.0
        %605 = vmatpush1.msra.mxu0 0.0
        %606 = vmatprep.subr.mxu0 0.0
        %607 = vmatpush1.msra.mxu0 0.0
        %608 = vmatprep.subr.mxu0 0.0
        %609 = vmatpush1.msra.mxu0 0.0
        %610 = vmatprep.subr.mxu0 0.0
        %611 = vmatpush1.msra.mxu0 0.0
        %612 = vmatprep.subr.mxu0 0.0
        %613 = vmatpush1.msra.mxu0 0.0
        %614 = vmatprep.subr.mxu0 0.0
        %615 = vmatpush1.msra.mxu0 0.0
        %616 = vmatprep.subr.mxu0 0.0
        %617 = vmatpush1.msra.mxu0 0.0
        %618 = vmatprep.subr.mxu0 0.0
        %619 = vmatpush1.msra.mxu0 0.0
        %620 = vmatprep.subr.mxu0 0.0
        %621 = vmatpush1.msra.mxu0 0.0
        %622 = vmatprep.subr.mxu0 0.0
        %623 = vmatpush1.msra.mxu0 0.0
        %624 = vmatprep.subr.mxu0 0.0
        %625 = vmatpush1.msra.mxu0 0.0
        %626 = vmatprep.subr.mxu0 0.0
        %627 = vmatpush1.msra.mxu0 0.0
        %628 = vmatprep.subr.mxu0 0.0
        %v629 = vand.u32 %v230, 4294901760
        %630 = vmatpush1.msra.mxu0 %v629
        %631 = vmatprep.subr.mxu0 0.0
        %v632 = vand.u32 %v229, 4294901760
        %633 = vmatpush1.msra.mxu0 %v632
        %634 = vmatprep.subr.mxu0 0.0
        %635 = vmatpush2.msra.mxu0 0.0
        %636 = vmatprep.subr.mxu0 0.0
        %637 = vmatpush2.msra.mxu0 0.0
        %638 = vmatprep.subr.mxu0 0.0
        %639 = vmatpush2.msra.mxu0 0.0
        %640 = vmatprep.subr.mxu0 0.0
        %641 = vmatpush2.msra.mxu0 0.0
        %642 = vmatprep.subr.mxu0 0.0
        %643 = vmatpush2.msra.mxu0 0.0
        %644 = vmatprep.subr.mxu0 0.0
        %645 = vmatpush2.msra.mxu0 0.0
        %646 = vmatprep.subr.mxu0 0.0
        %647 = vmatpush2.msra.mxu0 0.0
        %648 = vmatprep.subr.mxu0 0.0
        %649 = vmatpush2.msra.mxu0 0.0
        %650 = vmatprep.subr.mxu0 0.0
        %651 = vmatpush2.msra.mxu0 0.0
        %652 = vmatprep.subr.mxu0 0.0
        %653 = vmatpush2.msra.mxu0 0.0
        %654 = vmatprep.subr.mxu0 0.0
        %655 = vmatpush2.msra.mxu0 0.0
        %656 = vmatprep.subr.mxu0 0.0
        %657 = vmatpush2.msra.mxu0 0.0
        %658 = vmatprep.subr.mxu0 0.0
        %659 = vmatpush2.msra.mxu0 0.0
        %660 = vmatprep.subr.mxu0 0.0
        %661 = vmatpush2.msra.mxu0 0.0
        %662 = vmatprep.subr.mxu0 0.0
        %663 = vmatpush2.msra.mxu0 0.0
        %664 = vmatprep.subr.mxu0 0.0
        %665 = vmatpush2.msra.mxu0 0.0
        %666 = vmatprep.mubr.f32.mxu0 0.0
        %v667 = vand.u32 %v286, 4294901760
        %v668 = vsub.f32 %v286, %v667
        %v669 = vand.u32 %v668, 4294901760
        %670 = vmatmul.mubr.f32.gmra.mxu0 %v669
        %v671 = vpop.f32.mrf.mxu0
        %v672 = vadd.f32 %v576, %v671
        %v673 = vpop.f32.mrf.mxu0
        %674 = vmatprep.mubr.f32.mxu0 0.0
        %v675 = vand.u32 %v289, 4294901760
        %v676 = vsub.f32 %v289, %v675
        %v677 = vand.u32 %v676, 4294901760
        %678 = vmatmul.mubr.f32.gmra.mxu0 %v677
        %v679 = vpop.f32.mrf.mxu0
        %v680 = vadd.f32 %v583, %v679
        %v681 = vpop.f32.mrf.mxu0
        %682 = vmatprep.mubr.f32.mxu0 0.0
        %v683 = vand.u32 %v292, 4294901760
        %v684 = vsub.f32 %v292, %v683
        %v685 = vand.u32 %v684, 4294901760
        %686 = vmatmul.mubr.f32.gmra.mxu0 %v685
        %v687 = vpop.f32.mrf.mxu0
        %v688 = vadd.f32 %v590, %v687
        %v689 = vpop.f32.mrf.mxu0
        %690 = vmatprep.mubr.f32.mxu0 0.0
        %v691 = vand.u32 %v295, 4294901760
        %v692 = vsub.f32 %v295, %v691
        %v693 = vand.u32 %v692, 4294901760
        %694 = vmatmul.mubr.f32.gmra.mxu0 %v693
        %v695 = vpop.f32.mrf.mxu0
        %v696 = vadd.f32 %v597, %v695
        %v697 = vpop.f32.mrf.mxu0
        %698 = vdwg.mxu0
        %699 = vmatprep.subr.mxu0 0.0
        %700 = vmatpush1.msra.mxu0 0.0
        %701 = vmatprep.subr.mxu0 0.0
        %702 = vmatpush1.msra.mxu0 0.0
        %703 = vmatprep.subr.mxu0 0.0
        %704 = vmatpush1.msra.mxu0 0.0
        %705 = vmatprep.subr.mxu0 0.0
        %706 = vmatpush1.msra.mxu0 0.0
        %707 = vmatprep.subr.mxu0 0.0
        %708 = vmatpush1.msra.mxu0 0.0
        %709 = vmatprep.subr.mxu0 0.0
        %710 = vmatpush1.msra.mxu0 0.0
        %711 = vmatprep.subr.mxu0 0.0
        %712 = vmatpush1.msra.mxu0 0.0
        %713 = vmatprep.subr.mxu0 0.0
        %714 = vmatpush1.msra.mxu0 0.0
        %715 = vmatprep.subr.mxu0 0.0
        %716 = vmatpush1.msra.mxu0 0.0
        %717 = vmatprep.subr.mxu0 0.0
        %718 = vmatpush1.msra.mxu0 0.0
        %719 = vmatprep.subr.mxu0 0.0
        %720 = vmatpush1.msra.mxu0 0.0
        %721 = vmatprep.subr.mxu0 0.0
        %722 = vmatpush1.msra.mxu0 0.0
        %723 = vmatprep.subr.mxu0 0.0
        %724 = vmatpush1.msra.mxu0 0.0
        %725 = vmatprep.subr.mxu0 0.0
        %726 = vmatpush1.msra.mxu0 0.0
        %727 = vmatprep.subr.mxu0 0.0
        %v728 = vand.u32 %v230, 4294901760
        %v729 = vsub.f32 %v230, %v728
        %v730 = vand.u32 %v729, 4294901760
        %731 = vmatpush1.msra.mxu0 %v730
        %732 = vmatprep.subr.mxu0 0.0
        %v733 = vand.u32 %v229, 4294901760
        %v734 = vsub.f32 %v229, %v733
        %v735 = vand.u32 %v734, 4294901760
        %736 = vmatpush1.msra.mxu0 %v735
        %737 = vmatprep.subr.mxu0 0.0
        %738 = vmatpush2.msra.mxu0 0.0
        %739 = vmatprep.subr.mxu0 0.0
        %740 = vmatpush2.msra.mxu0 0.0
        %741 = vmatprep.subr.mxu0 0.0
        %742 = vmatpush2.msra.mxu0 0.0
        %743 = vmatprep.subr.mxu0 0.0
        %744 = vmatpush2.msra.mxu0 0.0
        %745 = vmatprep.subr.mxu0 0.0
        %746 = vmatpush2.msra.mxu0 0.0
        %747 = vmatprep.subr.mxu0 0.0
        %748 = vmatpush2.msra.mxu0 0.0
        %749 = vmatprep.subr.mxu0 0.0
        %750 = vmatpush2.msra.mxu0 0.0
        %751 = vmatprep.subr.mxu0 0.0
        %752 = vmatpush2.msra.mxu0 0.0
        %753 = vmatprep.subr.mxu0 0.0
        %754 = vmatpush2.msra.mxu0 0.0
        %755 = vmatprep.subr.mxu0 0.0
        %756 = vmatpush2.msra.mxu0 0.0
        %757 = vmatprep.subr.mxu0 0.0
        %758 = vmatpush2.msra.mxu0 0.0
        %759 = vmatprep.subr.mxu0 0.0
        %760 = vmatpush2.msra.mxu0 0.0
        %761 = vmatprep.subr.mxu0 0.0
        %762 = vmatpush2.msra.mxu0 0.0
        %763 = vmatprep.subr.mxu0 0.0
        %764 = vmatpush2.msra.mxu0 0.0
        %765 = vmatprep.subr.mxu0 0.0
        %766 = vmatpush2.msra.mxu0 0.0
        %767 = vmatprep.subr.mxu0 0.0
        %768 = vmatpush2.msra.mxu0 0.0
        %769 = vmatprep.mubr.f32.mxu0 0.0
        %v770 = vand.u32 %v286, 4294901760
        %771 = vmatmul.mubr.f32.gmra.mxu0 %v770
        %v772 = vpop.f32.mrf.mxu0
        %v773 = vadd.f32 %v672, %v772
        %v774 = vpop.f32.mrf.mxu0
        %775 = vmatprep.mubr.f32.mxu0 0.0
        %v776 = vand.u32 %v289, 4294901760
        %777 = vmatmul.mubr.f32.gmra.mxu0 %v776
        %v778 = vpop.f32.mrf.mxu0
        %v779 = vadd.f32 %v680, %v778
        %v780 = vpop.f32.mrf.mxu0
        %781 = vmatprep.mubr.f32.mxu0 0.0
        %v782 = vand.u32 %v292, 4294901760
        %783 = vmatmul.mubr.f32.gmra.mxu0 %v782
        %v784 = vpop.f32.mrf.mxu0
        %v785 = vadd.f32 %v688, %v784
        %v786 = vpop.f32.mrf.mxu0
        %787 = vmatprep.mubr.f32.mxu0 0.0
        %v788 = vand.u32 %v295, 4294901760
        %789 = vmatmul.mubr.f32.gmra.mxu0 %v788
        %v790 = vpop.f32.mrf.mxu0
        %v791 = vadd.f32 %v696, %v790
        %v792 = vpop.f32.mrf.mxu0
        %793 = vdwg.mxu0
        %794 = vmatprep.subr.mxu0 0.0
        %795 = vmatpush1.msra.mxu0 0.0
        %796 = vmatprep.subr.mxu0 0.0
        %797 = vmatpush1.msra.mxu0 0.0
        %798 = vmatprep.subr.mxu0 0.0
        %799 = vmatpush1.msra.mxu0 0.0
        %800 = vmatprep.subr.mxu0 0.0
        %801 = vmatpush1.msra.mxu0 0.0
        %802 = vmatprep.subr.mxu0 0.0
        %803 = vmatpush1.msra.mxu0 0.0
        %804 = vmatprep.subr.mxu0 0.0
        %805 = vmatpush1.msra.mxu0 0.0
        %806 = vmatprep.subr.mxu0 0.0
        %807 = vmatpush1.msra.mxu0 0.0
        %808 = vmatprep.subr.mxu0 0.0
        %809 = vmatpush1.msra.mxu0 0.0
        %810 = vmatprep.subr.mxu0 0.0
        %811 = vmatpush1.msra.mxu0 0.0
        %812 = vmatprep.subr.mxu0 0.0
        %813 = vmatpush1.msra.mxu0 0.0
        %814 = vmatprep.subr.mxu0 0.0
        %815 = vmatpush1.msra.mxu0 0.0
        %816 = vmatprep.subr.mxu0 0.0
        %817 = vmatpush1.msra.mxu0 0.0
        %818 = vmatprep.subr.mxu0 0.0
        %819 = vmatpush1.msra.mxu0 0.0
        %820 = vmatprep.subr.mxu0 0.0
        %821 = vmatpush1.msra.mxu0 0.0
        %822 = vmatprep.subr.mxu0 0.0
        %v823 = vand.u32 %v230, 4294901760
        %824 = vmatpush1.msra.mxu0 %v823
        %825 = vmatprep.subr.mxu0 0.0
        %v826 = vand.u32 %v229, 4294901760
        %827 = vmatpush1.msra.mxu0 %v826
        %828 = vmatprep.subr.mxu0 0.0
        %829 = vmatpush2.msra.mxu0 0.0
        %830 = vmatprep.subr.mxu0 0.0
        %831 = vmatpush2.msra.mxu0 0.0
        %832 = vmatprep.subr.mxu0 0.0
        %833 = vmatpush2.msra.mxu0 0.0
        %834 = vmatprep.subr.mxu0 0.0
        %835 = vmatpush2.msra.mxu0 0.0
        %836 = vmatprep.subr.mxu0 0.0
        %837 = vmatpush2.msra.mxu0 0.0
        %838 = vmatprep.subr.mxu0 0.0
        %839 = vmatpush2.msra.mxu0 0.0
        %840 = vmatprep.subr.mxu0 0.0
        %841 = vmatpush2.msra.mxu0 0.0
        %842 = vmatprep.subr.mxu0 0.0
        %843 = vmatpush2.msra.mxu0 0.0
        %844 = vmatprep.subr.mxu0 0.0
        %845 = vmatpush2.msra.mxu0 0.0
        %846 = vmatprep.subr.mxu0 0.0
        %847 = vmatpush2.msra.mxu0 0.0
        %848 = vmatprep.subr.mxu0 0.0
        %849 = vmatpush2.msra.mxu0 0.0
        %850 = vmatprep.subr.mxu0 0.0
        %851 = vmatpush2.msra.mxu0 0.0
        %852 = vmatprep.subr.mxu0 0.0
        %853 = vmatpush2.msra.mxu0 0.0
        %854 = vmatprep.subr.mxu0 0.0
        %855 = vmatpush2.msra.mxu0 0.0
        %856 = vmatprep.subr.mxu0 0.0
        %857 = vmatpush2.msra.mxu0 0.0
        %858 = vmatprep.subr.mxu0 0.0
        %859 = vmatpush2.msra.mxu0 0.0
        %860 = vmatprep.mubr.f32.mxu0 0.0
        %v861 = vand.u32 %v286, 4294901760
        %862 = vmatmul.mubr.f32.gmra.mxu0 %v861
        %v863 = vpop.f32.mrf.mxu0
        %v864 = vadd.f32 %v773, %v863
        %v865 = vpop.f32.mrf.mxu0
        %866 = vmatprep.mubr.f32.mxu0 0.0
        %v867 = vand.u32 %v289, 4294901760
        %868 = vmatmul.mubr.f32.gmra.mxu0 %v867
        %v869 = vpop.f32.mrf.mxu0
        %v870 = vadd.f32 %v779, %v869
        %v871 = vpop.f32.mrf.mxu0
        %872 = vmatprep.mubr.f32.mxu0 0.0
        %v873 = vand.u32 %v292, 4294901760
        %874 = vmatmul.mubr.f32.gmra.mxu0 %v873
        %v875 = vpop.f32.mrf.mxu0
        %v876 = vadd.f32 %v785, %v875
        %v877 = vpop.f32.mrf.mxu0
        %878 = vmatprep.mubr.f32.mxu0 0.0
        %v879 = vand.u32 %v295, 4294901760
        %880 = vmatmul.mubr.f32.gmra.mxu0 %v879
        %v881 = vpop.f32.mrf.mxu0
        %v882 = vadd.f32 %v791, %v881
        %v883 = vpop.f32.mrf.mxu0
        %884 = vdwg.mxu0
        %vm885 = vcmask 195584
        %v887 = vsel %vm885, %v280, 0
        %v890 = vsel %vm885, %v281, 0
        %v893 = vsel %vm885, %v282, 0
        %v896 = vsel %vm885, %v283, 0
        %898 = vmatprep.subr.mxu0 0.0
        %899 = vmatpush1.msra.mxu0 0.0
        %900 = vmatprep.subr.mxu0 0.0
        %901 = vmatpush1.msra.mxu0 0.0
        %902 = vmatprep.subr.mxu0 0.0
        %903 = vmatpush1.msra.mxu0 0.0
        %904 = vmatprep.subr.mxu0 0.0
        %905 = vmatpush1.msra.mxu0 0.0
        %906 = vmatprep.subr.mxu0 0.0
        %907 = vmatpush1.msra.mxu0 0.0
        %908 = vmatprep.subr.mxu0 0.0
        %909 = vmatpush1.msra.mxu0 0.0
        %910 = vmatprep.subr.mxu0 0.0
        %911 = vmatpush1.msra.mxu0 0.0
        %912 = vmatprep.subr.mxu0 0.0
        %913 = vmatpush1.msra.mxu0 0.0
        %914 = vmatprep.subr.mxu0 0.0
        %915 = vmatpush1.msra.mxu0 0.0
        %916 = vmatprep.subr.mxu0 0.0
        %917 = vmatpush1.msra.mxu0 0.0
        %918 = vmatprep.subr.mxu0 0.0
        %919 = vmatpush1.msra.mxu0 0.0
        %920 = vmatprep.subr.mxu0 0.0
        %921 = vmatpush1.msra.mxu0 0.0
        %922 = vmatprep.subr.mxu0 0.0
        %923 = vmatpush1.msra.mxu0 0.0
        %924 = vmatprep.subr.mxu0 0.0
        %v925 = vand.u32 %v233, 4294901760
        %926 = vmatpush1.msra.mxu0 %v925
        %927 = vmatprep.subr.mxu0 0.0
        %v928 = vand.u32 %v232, 4294901760
        %929 = vmatpush1.msra.mxu0 %v928
        %930 = vmatprep.subr.mxu0 0.0
        %v931 = vand.u32 %v231, 4294901760
        %932 = vmatpush1.msra.mxu0 %v931
        %933 = vmatprep.subr.mxu0 0.0
        %934 = vmatpush2.msra.mxu0 0.0
        %935 = vmatprep.subr.mxu0 0.0
        %936 = vmatpush2.msra.mxu0 0.0
        %937 = vmatprep.subr.mxu0 0.0
        %938 = vmatpush2.msra.mxu0 0.0
        %939 = vmatprep.subr.mxu0 0.0
        %940 = vmatpush2.msra.mxu0 0.0
        %941 = vmatprep.subr.mxu0 0.0
        %942 = vmatpush2.msra.mxu0 0.0
        %943 = vmatprep.subr.mxu0 0.0
        %944 = vmatpush2.msra.mxu0 0.0
        %945 = vmatprep.subr.mxu0 0.0
        %946 = vmatpush2.msra.mxu0 0.0
        %947 = vmatprep.subr.mxu0 0.0
        %948 = vmatpush2.msra.mxu0 0.0
        %949 = vmatprep.subr.mxu0 0.0
        %950 = vmatpush2.msra.mxu0 0.0
        %951 = vmatprep.subr.mxu0 0.0
        %952 = vmatpush2.msra.mxu0 0.0
        %953 = vmatprep.subr.mxu0 0.0
        %954 = vmatpush2.msra.mxu0 0.0
        %955 = vmatprep.subr.mxu0 0.0
        %956 = vmatpush2.msra.mxu0 0.0
        %957 = vmatprep.subr.mxu0 0.0
        %958 = vmatpush2.msra.mxu0 0.0
        %959 = vmatprep.subr.mxu0 0.0
        %960 = vmatpush2.msra.mxu0 0.0
        %961 = vmatprep.subr.mxu0 0.0
        %962 = vmatpush2.msra.mxu0 0.0
        %963 = vmatprep.subr.mxu0 0.0
        %964 = vmatpush2.msra.mxu0 0.0
        %965 = vmatprep.mubr.f32.mxu0 0.0
        %v966 = vand.u32 %v887, 4294901760
        %v967 = vsub.f32 %v887, %v966
        %v968 = vand.u32 %v967, 4294901760
        %v969 = vsub.f32 %v967, %v968
        %v970 = vand.u32 %v969, 4294901760
        %971 = vmatmul.mubr.f32.gmra.mxu0 %v970
        %v972 = vpop.f32.mrf.mxu0
        %v973 = vadd.f32 0.0, %v972
        %v974 = vpop.f32.mrf.mxu0
        %975 = vmatprep.mubr.f32.mxu0 0.0
        %v976 = vand.u32 %v890, 4294901760
        %v977 = vsub.f32 %v890, %v976
        %v978 = vand.u32 %v977, 4294901760
        %v979 = vsub.f32 %v977, %v978
        %v980 = vand.u32 %v979, 4294901760
        %981 = vmatmul.mubr.f32.gmra.mxu0 %v980
        %v982 = vpop.f32.mrf.mxu0
        %v983 = vadd.f32 0.0, %v982
        %v984 = vpop.f32.mrf.mxu0
        %985 = vmatprep.mubr.f32.mxu0 0.0
        %v986 = vand.u32 %v893, 4294901760
        %v987 = vsub.f32 %v893, %v986
        %v988 = vand.u32 %v987, 4294901760
        %v989 = vsub.f32 %v987, %v988
        %v990 = vand.u32 %v989, 4294901760
        %991 = vmatmul.mubr.f32.gmra.mxu0 %v990
        %v992 = vpop.f32.mrf.mxu0
        %v993 = vadd.f32 0.0, %v992
        %v994 = vpop.f32.mrf.mxu0
        %995 = vmatprep.mubr.f32.mxu0 0.0
        %v996 = vand.u32 %v896, 4294901760
        %v997 = vsub.f32 %v896, %v996
        %v998 = vand.u32 %v997, 4294901760
        %v999 = vsub.f32 %v997, %v998
        %v1000 = vand.u32 %v999, 4294901760
        %1001 = vmatmul.mubr.f32.gmra.mxu0 %v1000
        %v1002 = vpop.f32.mrf.mxu0
        %v1003 = vadd.f32 0.0, %v1002
        %v1004 = vpop.f32.mrf.mxu0
        %1005 = vdwg.mxu0
        %1006 = vmatprep.subr.mxu0 0.0
        %1007 = vmatpush1.msra.mxu0 0.0
        %1008 = vmatprep.subr.mxu0 0.0
        %1009 = vmatpush1.msra.mxu0 0.0
        %1010 = vmatprep.subr.mxu0 0.0
        %1011 = vmatpush1.msra.mxu0 0.0
        %1012 = vmatprep.subr.mxu0 0.0
        %1013 = vmatpush1.msra.mxu0 0.0
        %1014 = vmatprep.subr.mxu0 0.0
        %1015 = vmatpush1.msra.mxu0 0.0
        %1016 = vmatprep.subr.mxu0 0.0
        %1017 = vmatpush1.msra.mxu0 0.0
        %1018 = vmatprep.subr.mxu0 0.0
        %1019 = vmatpush1.msra.mxu0 0.0
        %1020 = vmatprep.subr.mxu0 0.0
        %1021 = vmatpush1.msra.mxu0 0.0
        %1022 = vmatprep.subr.mxu0 0.0
        %1023 = vmatpush1.msra.mxu0 0.0
        %1024 = vmatprep.subr.mxu0 0.0
        %1025 = vmatpush1.msra.mxu0 0.0
        %1026 = vmatprep.subr.mxu0 0.0
        %1027 = vmatpush1.msra.mxu0 0.0
        %1028 = vmatprep.subr.mxu0 0.0
        %1029 = vmatpush1.msra.mxu0 0.0
        %1030 = vmatprep.subr.mxu0 0.0
        %1031 = vmatpush1.msra.mxu0 0.0
        %1032 = vmatprep.subr.mxu0 0.0
        %v1033 = vand.u32 %v233, 4294901760
        %v1034 = vsub.f32 %v233, %v1033
        %v1035 = vand.u32 %v1034, 4294901760
        %v1036 = vsub.f32 %v1034, %v1035
        %v1037 = vand.u32 %v1036, 4294901760
        %1038 = vmatpush1.msra.mxu0 %v1037
        %1039 = vmatprep.subr.mxu0 0.0
        %v1040 = vand.u32 %v232, 4294901760
        %v1041 = vsub.f32 %v232, %v1040
        %v1042 = vand.u32 %v1041, 4294901760
        %v1043 = vsub.f32 %v1041, %v1042
        %v1044 = vand.u32 %v1043, 4294901760
        %1045 = vmatpush1.msra.mxu0 %v1044
        %1046 = vmatprep.subr.mxu0 0.0
        %v1047 = vand.u32 %v231, 4294901760
        %v1048 = vsub.f32 %v231, %v1047
        %v1049 = vand.u32 %v1048, 4294901760
        %v1050 = vsub.f32 %v1048, %v1049
        %v1051 = vand.u32 %v1050, 4294901760
        %1052 = vmatpush1.msra.mxu0 %v1051
        %1053 = vmatprep.subr.mxu0 0.0
        %1054 = vmatpush2.msra.mxu0 0.0
        %1055 = vmatprep.subr.mxu0 0.0
        %1056 = vmatpush2.msra.mxu0 0.0
        %1057 = vmatprep.subr.mxu0 0.0
        %1058 = vmatpush2.msra.mxu0 0.0
        %1059 = vmatprep.subr.mxu0 0.0
        %1060 = vmatpush2.msra.mxu0 0.0
        %1061 = vmatprep.subr.mxu0 0.0
        %1062 = vmatpush2.msra.mxu0 0.0
        %1063 = vmatprep.subr.mxu0 0.0
        %1064 = vmatpush2.msra.mxu0 0.0
        %1065 = vmatprep.subr.mxu0 0.0
        %1066 = vmatpush2.msra.mxu0 0.0
        %1067 = vmatprep.subr.mxu0 0.0
        %1068 = vmatpush2.msra.mxu0 0.0
        %1069 = vmatprep.subr.mxu0 0.0
        %1070 = vmatpush2.msra.mxu0 0.0
        %1071 = vmatprep.subr.mxu0 0.0
        %1072 = vmatpush2.msra.mxu0 0.0
        %1073 = vmatprep.subr.mxu0 0.0
        %1074 = vmatpush2.msra.mxu0 0.0
        %1075 = vmatprep.subr.mxu0 0.0
        %1076 = vmatpush2.msra.mxu0 0.0
        %1077 = vmatprep.subr.mxu0 0.0
        %1078 = vmatpush2.msra.mxu0 0.0
        %1079 = vmatprep.subr.mxu0 0.0
        %1080 = vmatpush2.msra.mxu0 0.0
        %1081 = vmatprep.subr.mxu0 0.0
        %1082 = vmatpush2.msra.mxu0 0.0
        %1083 = vmatprep.subr.mxu0 0.0
        %1084 = vmatpush2.msra.mxu0 0.0
        %1085 = vmatprep.mubr.f32.mxu0 0.0
        %v1086 = vand.u32 %v887, 4294901760
        %1087 = vmatmul.mubr.f32.gmra.mxu0 %v1086
        %v1088 = vpop.f32.mrf.mxu0
        %v1089 = vadd.f32 %v973, %v1088
        %v1090 = vpop.f32.mrf.mxu0
        %1091 = vmatprep.mubr.f32.mxu0 0.0
        %v1092 = vand.u32 %v890, 4294901760
        %1093 = vmatmul.mubr.f32.gmra.mxu0 %v1092
        %v1094 = vpop.f32.mrf.mxu0
        %v1095 = vadd.f32 %v983, %v1094
        %v1096 = vpop.f32.mrf.mxu0
        %1097 = vmatprep.mubr.f32.mxu0 0.0
        %v1098 = vand.u32 %v893, 4294901760
        %1099 = vmatmul.mubr.f32.gmra.mxu0 %v1098
        %v1100 = vpop.f32.mrf.mxu0
        %v1101 = vadd.f32 %v993, %v1100
        %v1102 = vpop.f32.mrf.mxu0
        %1103 = vmatprep.mubr.f32.mxu0 0.0
        %v1104 = vand.u32 %v896, 4294901760
        %1105 = vmatmul.mubr.f32.gmra.mxu0 %v1104
        %v1106 = vpop.f32.mrf.mxu0
        %v1107 = vadd.f32 %v1003, %v1106
        %v1108 = vpop.f32.mrf.mxu0
        %1109 = vdwg.mxu0
        %1110 = vmatprep.subr.mxu0 0.0
        %1111 = vmatpush1.msra.mxu0 0.0
        %1112 = vmatprep.subr.mxu0 0.0
        %1113 = vmatpush1.msra.mxu0 0.0
        %1114 = vmatprep.subr.mxu0 0.0
        %1115 = vmatpush1.msra.mxu0 0.0
        %1116 = vmatprep.subr.mxu0 0.0
        %1117 = vmatpush1.msra.mxu0 0.0
        %1118 = vmatprep.subr.mxu0 0.0
        %1119 = vmatpush1.msra.mxu0 0.0
        %1120 = vmatprep.subr.mxu0 0.0
        %1121 = vmatpush1.msra.mxu0 0.0
        %1122 = vmatprep.subr.mxu0 0.0
        %1123 = vmatpush1.msra.mxu0 0.0
        %1124 = vmatprep.subr.mxu0 0.0
        %1125 = vmatpush1.msra.mxu0 0.0
        %1126 = vmatprep.subr.mxu0 0.0
        %1127 = vmatpush1.msra.mxu0 0.0
        %1128 = vmatprep.subr.mxu0 0.0
        %1129 = vmatpush1.msra.mxu0 0.0
        %1130 = vmatprep.subr.mxu0 0.0
        %1131 = vmatpush1.msra.mxu0 0.0
        %1132 = vmatprep.subr.mxu0 0.0
        %1133 = vmatpush1.msra.mxu0 0.0
        %1134 = vmatprep.subr.mxu0 0.0
        %1135 = vmatpush1.msra.mxu0 0.0
        %1136 = vmatprep.subr.mxu0 0.0
        %v1137 = vand.u32 %v233, 4294901760
        %v1138 = vsub.f32 %v233, %v1137
        %1139 = vmatpush1.msra.mxu0 %v1138
        %1140 = vmatprep.subr.mxu0 0.0
        %v1141 = vand.u32 %v232, 4294901760
        %v1142 = vsub.f32 %v232, %v1141
        %1143 = vmatpush1.msra.mxu0 %v1142
        %1144 = vmatprep.subr.mxu0 0.0
        %v1145 = vand.u32 %v231, 4294901760
        %v1146 = vsub.f32 %v231, %v1145
        %1147 = vmatpush1.msra.mxu0 %v1146
        %1148 = vmatprep.subr.mxu0 0.0
        %1149 = vmatpush2.msra.mxu0 0.0
        %1150 = vmatprep.subr.mxu0 0.0
        %1151 = vmatpush2.msra.mxu0 0.0
        %1152 = vmatprep.subr.mxu0 0.0
        %1153 = vmatpush2.msra.mxu0 0.0
        %1154 = vmatprep.subr.mxu0 0.0
        %1155 = vmatpush2.msra.mxu0 0.0
        %1156 = vmatprep.subr.mxu0 0.0
        %1157 = vmatpush2.msra.mxu0 0.0
        %1158 = vmatprep.subr.mxu0 0.0
        %1159 = vmatpush2.msra.mxu0 0.0
        %1160 = vmatprep.subr.mxu0 0.0
        %1161 = vmatpush2.msra.mxu0 0.0
        %1162 = vmatprep.subr.mxu0 0.0
        %1163 = vmatpush2.msra.mxu0 0.0
        %1164 = vmatprep.subr.mxu0 0.0
        %1165 = vmatpush2.msra.mxu0 0.0
        %1166 = vmatprep.subr.mxu0 0.0
        %1167 = vmatpush2.msra.mxu0 0.0
        %1168 = vmatprep.subr.mxu0 0.0
        %1169 = vmatpush2.msra.mxu0 0.0
        %1170 = vmatprep.subr.mxu0 0.0
        %1171 = vmatpush2.msra.mxu0 0.0
        %1172 = vmatprep.subr.mxu0 0.0
        %1173 = vmatpush2.msra.mxu0 0.0
        %1174 = vmatprep.subr.mxu0 0.0
        %1175 = vmatpush2.msra.mxu0 0.0
        %1176 = vmatprep.subr.mxu0 0.0
        %1177 = vmatpush2.msra.mxu0 0.0
        %1178 = vmatprep.subr.mxu0 0.0
        %1179 = vmatpush2.msra.mxu0 0.0
        %1180 = vmatprep.mubr.f32.mxu0 0.0
        %v1181 = vand.u32 %v887, 4294901760
        %v1182 = vsub.f32 %v887, %v1181
        %1183 = vmatmul.mubr.f32.gmra.mxu0 %v1182
        %v1184 = vpop.f32.mrf.mxu0
        %v1185 = vadd.f32 %v1089, %v1184
        %v1186 = vpop.f32.mrf.mxu0
        %1187 = vmatprep.mubr.f32.mxu0 0.0
        %v1188 = vand.u32 %v890, 4294901760
        %v1189 = vsub.f32 %v890, %v1188
        %1190 = vmatmul.mubr.f32.gmra.mxu0 %v1189
        %v1191 = vpop.f32.mrf.mxu0
        %v1192 = vadd.f32 %v1095, %v1191
        %v1193 = vpop.f32.mrf.mxu0
        %1194 = vmatprep.mubr.f32.mxu0 0.0
        %v1195 = vand.u32 %v893, 4294901760
        %v1196 = vsub.f32 %v893, %v1195
        %1197 = vmatmul.mubr.f32.gmra.mxu0 %v1196
        %v1198 = vpop.f32.mrf.mxu0
        %v1199 = vadd.f32 %v1101, %v1198
        %v1200 = vpop.f32.mrf.mxu0
        %1201 = vmatprep.mubr.f32.mxu0 0.0
        %v1202 = vand.u32 %v896, 4294901760
        %v1203 = vsub.f32 %v896, %v1202
        %1204 = vmatmul.mubr.f32.gmra.mxu0 %v1203
        %v1205 = vpop.f32.mrf.mxu0
        %v1206 = vadd.f32 %v1107, %v1205
        %v1207 = vpop.f32.mrf.mxu0
        %1208 = vdwg.mxu0
        %1209 = vmatprep.subr.mxu0 0.0
        %1210 = vmatpush1.msra.mxu0 0.0
        %1211 = vmatprep.subr.mxu0 0.0
        %1212 = vmatpush1.msra.mxu0 0.0
        %1213 = vmatprep.subr.mxu0 0.0
        %1214 = vmatpush1.msra.mxu0 0.0
        %1215 = vmatprep.subr.mxu0 0.0
        %1216 = vmatpush1.msra.mxu0 0.0
        %1217 = vmatprep.subr.mxu0 0.0
        %1218 = vmatpush1.msra.mxu0 0.0
        %1219 = vmatprep.subr.mxu0 0.0
        %1220 = vmatpush1.msra.mxu0 0.0
        %1221 = vmatprep.subr.mxu0 0.0
        %1222 = vmatpush1.msra.mxu0 0.0
        %1223 = vmatprep.subr.mxu0 0.0
        %1224 = vmatpush1.msra.mxu0 0.0
        %1225 = vmatprep.subr.mxu0 0.0
        %1226 = vmatpush1.msra.mxu0 0.0
        %1227 = vmatprep.subr.mxu0 0.0
        %1228 = vmatpush1.msra.mxu0 0.0
        %1229 = vmatprep.subr.mxu0 0.0
        %1230 = vmatpush1.msra.mxu0 0.0
        %1231 = vmatprep.subr.mxu0 0.0
        %1232 = vmatpush1.msra.mxu0 0.0
        %1233 = vmatprep.subr.mxu0 0.0
        %1234 = vmatpush1.msra.mxu0 0.0
        %1235 = vmatprep.subr.mxu0 0.0
        %v1236 = vand.u32 %v233, 4294901760
        %1237 = vmatpush1.msra.mxu0 %v1236
        %1238 = vmatprep.subr.mxu0 0.0
        %v1239 = vand.u32 %v232, 4294901760
        %1240 = vmatpush1.msra.mxu0 %v1239
        %1241 = vmatprep.subr.mxu0 0.0
        %v1242 = vand.u32 %v231, 4294901760
        %1243 = vmatpush1.msra.mxu0 %v1242
        %1244 = vmatprep.subr.mxu0 0.0
        %1245 = vmatpush2.msra.mxu0 0.0
        %1246 = vmatprep.subr.mxu0 0.0
        %1247 = vmatpush2.msra.mxu0 0.0
        %1248 = vmatprep.subr.mxu0 0.0
        %1249 = vmatpush2.msra.mxu0 0.0
        %1250 = vmatprep.subr.mxu0 0.0
        %1251 = vmatpush2.msra.mxu0 0.0
        %1252 = vmatprep.subr.mxu0 0.0
        %1253 = vmatpush2.msra.mxu0 0.0
        %1254 = vmatprep.subr.mxu0 0.0
        %1255 = vmatpush2.msra.mxu0 0.0
        %1256 = vmatprep.subr.mxu0 0.0
        %1257 = vmatpush2.msra.mxu0 0.0
        %1258 = vmatprep.subr.mxu0 0.0
        %1259 = vmatpush2.msra.mxu0 0.0
        %1260 = vmatprep.subr.mxu0 0.0
        %1261 = vmatpush2.msra.mxu0 0.0
        %1262 = vmatprep.subr.mxu0 0.0
        %1263 = vmatpush2.msra.mxu0 0.0
        %1264 = vmatprep.subr.mxu0 0.0
        %1265 = vmatpush2.msra.mxu0 0.0
        %1266 = vmatprep.subr.mxu0 0.0
        %1267 = vmatpush2.msra.mxu0 0.0
        %1268 = vmatprep.subr.mxu0 0.0
        %1269 = vmatpush2.msra.mxu0 0.0
        %1270 = vmatprep.subr.mxu0 0.0
        %1271 = vmatpush2.msra.mxu0 0.0
        %1272 = vmatprep.subr.mxu0 0.0
        %1273 = vmatpush2.msra.mxu0 0.0
        %1274 = vmatprep.subr.mxu0 0.0
        %1275 = vmatpush2.msra.mxu0 0.0
        %1276 = vmatprep.mubr.f32.mxu0 0.0
        %v1277 = vand.u32 %v887, 4294901760
        %v1278 = vsub.f32 %v887, %v1277
        %v1279 = vand.u32 %v1278, 4294901760
        %1280 = vmatmul.mubr.f32.gmra.mxu0 %v1279
        %v1281 = vpop.f32.mrf.mxu0
        %v1282 = vadd.f32 %v1185, %v1281
        %v1283 = vpop.f32.mrf.mxu0
        %1284 = vmatprep.mubr.f32.mxu0 0.0
        %v1285 = vand.u32 %v890, 4294901760
        %v1286 = vsub.f32 %v890, %v1285
        %v1287 = vand.u32 %v1286, 4294901760
        %1288 = vmatmul.mubr.f32.gmra.mxu0 %v1287
        %v1289 = vpop.f32.mrf.mxu0
        %v1290 = vadd.f32 %v1192, %v1289
        %v1291 = vpop.f32.mrf.mxu0
        %1292 = vmatprep.mubr.f32.mxu0 0.0
        %v1293 = vand.u32 %v893, 4294901760
        %v1294 = vsub.f32 %v893, %v1293
        %v1295 = vand.u32 %v1294, 4294901760
        %1296 = vmatmul.mubr.f32.gmra.mxu0 %v1295
        %v1297 = vpop.f32.mrf.mxu0
        %v1298 = vadd.f32 %v1199, %v1297
        %v1299 = vpop.f32.mrf.mxu0
        %1300 = vmatprep.mubr.f32.mxu0 0.0
        %v1301 = vand.u32 %v896, 4294901760
        %v1302 = vsub.f32 %v896, %v1301
        %v1303 = vand.u32 %v1302, 4294901760
        %1304 = vmatmul.mubr.f32.gmra.mxu0 %v1303
        %v1305 = vpop.f32.mrf.mxu0
        %v1306 = vadd.f32 %v1206, %v1305
        %v1307 = vpop.f32.mrf.mxu0
        %1308 = vdwg.mxu0
        %1309 = vmatprep.subr.mxu0 0.0
        %1310 = vmatpush1.msra.mxu0 0.0
        %1311 = vmatprep.subr.mxu0 0.0
        %1312 = vmatpush1.msra.mxu0 0.0
        %1313 = vmatprep.subr.mxu0 0.0
        %1314 = vmatpush1.msra.mxu0 0.0
        %1315 = vmatprep.subr.mxu0 0.0
        %1316 = vmatpush1.msra.mxu0 0.0
        %1317 = vmatprep.subr.mxu0 0.0
        %1318 = vmatpush1.msra.mxu0 0.0
        %1319 = vmatprep.subr.mxu0 0.0
        %1320 = vmatpush1.msra.mxu0 0.0
        %1321 = vmatprep.subr.mxu0 0.0
        %1322 = vmatpush1.msra.mxu0 0.0
        %1323 = vmatprep.subr.mxu0 0.0
        %1324 = vmatpush1.msra.mxu0 0.0
        %1325 = vmatprep.subr.mxu0 0.0
        %1326 = vmatpush1.msra.mxu0 0.0
        %1327 = vmatprep.subr.mxu0 0.0
        %1328 = vmatpush1.msra.mxu0 0.0
        %1329 = vmatprep.subr.mxu0 0.0
        %1330 = vmatpush1.msra.mxu0 0.0
        %1331 = vmatprep.subr.mxu0 0.0
        %1332 = vmatpush1.msra.mxu0 0.0
        %1333 = vmatprep.subr.mxu0 0.0
        %1334 = vmatpush1.msra.mxu0 0.0
        %1335 = vmatprep.subr.mxu0 0.0
        %v1336 = vand.u32 %v233, 4294901760
        %v1337 = vsub.f32 %v233, %v1336
        %v1338 = vand.u32 %v1337, 4294901760
        %1339 = vmatpush1.msra.mxu0 %v1338
        %1340 = vmatprep.subr.mxu0 0.0
        %v1341 = vand.u32 %v232, 4294901760
        %v1342 = vsub.f32 %v232, %v1341
        %v1343 = vand.u32 %v1342, 4294901760
        %1344 = vmatpush1.msra.mxu0 %v1343
        %1345 = vmatprep.subr.mxu0 0.0
        %v1346 = vand.u32 %v231, 4294901760
        %v1347 = vsub.f32 %v231, %v1346
        %v1348 = vand.u32 %v1347, 4294901760
        %1349 = vmatpush1.msra.mxu0 %v1348
        %1350 = vmatprep.subr.mxu0 0.0
        %1351 = vmatpush2.msra.mxu0 0.0
        %1352 = vmatprep.subr.mxu0 0.0
        %1353 = vmatpush2.msra.mxu0 0.0
        %1354 = vmatprep.subr.mxu0 0.0
        %1355 = vmatpush2.msra.mxu0 0.0
        %1356 = vmatprep.subr.mxu0 0.0
        %1357 = vmatpush2.msra.mxu0 0.0
        %1358 = vmatprep.subr.mxu0 0.0
        %1359 = vmatpush2.msra.mxu0 0.0
        %1360 = vmatprep.subr.mxu0 0.0
        %1361 = vmatpush2.msra.mxu0 0.0
        %1362 = vmatprep.subr.mxu0 0.0
        %1363 = vmatpush2.msra.mxu0 0.0
        %1364 = vmatprep.subr.mxu0 0.0
        %1365 = vmatpush2.msra.mxu0 0.0
        %1366 = vmatprep.subr.mxu0 0.0
        %1367 = vmatpush2.msra.mxu0 0.0
        %1368 = vmatprep.subr.mxu0 0.0
        %1369 = vmatpush2.msra.mxu0 0.0
        %1370 = vmatprep.subr.mxu0 0.0
        %1371 = vmatpush2.msra.mxu0 0.0
        %1372 = vmatprep.subr.mxu0 0.0
        %1373 = vmatpush2.msra.mxu0 0.0
        %1374 = vmatprep.subr.mxu0 0.0
        %1375 = vmatpush2.msra.mxu0 0.0
        %1376 = vmatprep.subr.mxu0 0.0
        %1377 = vmatpush2.msra.mxu0 0.0
        %1378 = vmatprep.subr.mxu0 0.0
        %1379 = vmatpush2.msra.mxu0 0.0
        %1380 = vmatprep.subr.mxu0 0.0
        %1381 = vmatpush2.msra.mxu0 0.0
        %1382 = vmatprep.mubr.f32.mxu0 0.0
        %v1383 = vand.u32 %v887, 4294901760
        %1384 = vmatmul.mubr.f32.gmra.mxu0 %v1383
        %v1385 = vpop.f32.mrf.mxu0
        %v1386 = vadd.f32 %v1282, %v1385
        %v1387 = vpop.f32.mrf.mxu0
        %1388 = vmatprep.mubr.f32.mxu0 0.0
        %v1389 = vand.u32 %v890, 4294901760
        %1390 = vmatmul.mubr.f32.gmra.mxu0 %v1389
        %v1391 = vpop.f32.mrf.mxu0
        %v1392 = vadd.f32 %v1290, %v1391
        %v1393 = vpop.f32.mrf.mxu0
        %1394 = vmatprep.mubr.f32.mxu0 0.0
        %v1395 = vand.u32 %v893, 4294901760
        %1396 = vmatmul.mubr.f32.gmra.mxu0 %v1395
        %v1397 = vpop.f32.mrf.mxu0
        %v1398 = vadd.f32 %v1298, %v1397
        %v1399 = vpop.f32.mrf.mxu0
        %1400 = vmatprep.mubr.f32.mxu0 0.0
        %v1401 = vand.u32 %v896, 4294901760
        %1402 = vmatmul.mubr.f32.gmra.mxu0 %v1401
        %v1403 = vpop.f32.mrf.mxu0
        %v1404 = vadd.f32 %v1306, %v1403
        %v1405 = vpop.f32.mrf.mxu0
        %1406 = vdwg.mxu0
        %1407 = vmatprep.subr.mxu0 0.0
        %1408 = vmatpush1.msra.mxu0 0.0
        %1409 = vmatprep.subr.mxu0 0.0
        %1410 = vmatpush1.msra.mxu0 0.0
        %1411 = vmatprep.subr.mxu0 0.0
        %1412 = vmatpush1.msra.mxu0 0.0
        %1413 = vmatprep.subr.mxu0 0.0
        %1414 = vmatpush1.msra.mxu0 0.0
        %1415 = vmatprep.subr.mxu0 0.0
        %1416 = vmatpush1.msra.mxu0 0.0
        %1417 = vmatprep.subr.mxu0 0.0
        %1418 = vmatpush1.msra.mxu0 0.0
        %1419 = vmatprep.subr.mxu0 0.0
        %1420 = vmatpush1.msra.mxu0 0.0
        %1421 = vmatprep.subr.mxu0 0.0
        %1422 = vmatpush1.msra.mxu0 0.0
        %1423 = vmatprep.subr.mxu0 0.0
        %1424 = vmatpush1.msra.mxu0 0.0
        %1425 = vmatprep.subr.mxu0 0.0
        %1426 = vmatpush1.msra.mxu0 0.0
        %1427 = vmatprep.subr.mxu0 0.0
        %1428 = vmatpush1.msra.mxu0 0.0
        %1429 = vmatprep.subr.mxu0 0.0
        %1430 = vmatpush1.msra.mxu0 0.0
        %1431 = vmatprep.subr.mxu0 0.0
        %1432 = vmatpush1.msra.mxu0 0.0
        %1433 = vmatprep.subr.mxu0 0.0
        %v1434 = vand.u32 %v233, 4294901760
        %1435 = vmatpush1.msra.mxu0 %v1434
        %1436 = vmatprep.subr.mxu0 0.0
        %v1437 = vand.u32 %v232, 4294901760
        %1438 = vmatpush1.msra.mxu0 %v1437
        %1439 = vmatprep.subr.mxu0 0.0
        %v1440 = vand.u32 %v231, 4294901760
        %1441 = vmatpush1.msra.mxu0 %v1440
        %1442 = vmatprep.subr.mxu0 0.0
        %1443 = vmatpush2.msra.mxu0 0.0
        %1444 = vmatprep.subr.mxu0 0.0
        %1445 = vmatpush2.msra.mxu0 0.0
        %1446 = vmatprep.subr.mxu0 0.0
        %1447 = vmatpush2.msra.mxu0 0.0
        %1448 = vmatprep.subr.mxu0 0.0
        %1449 = vmatpush2.msra.mxu0 0.0
        %1450 = vmatprep.subr.mxu0 0.0
        %1451 = vmatpush2.msra.mxu0 0.0
        %1452 = vmatprep.subr.mxu0 0.0
        %1453 = vmatpush2.msra.mxu0 0.0
        %1454 = vmatprep.subr.mxu0 0.0
        %1455 = vmatpush2.msra.mxu0 0.0
        %1456 = vmatprep.subr.mxu0 0.0
        %1457 = vmatpush2.msra.mxu0 0.0
        %1458 = vmatprep.subr.mxu0 0.0
        %1459 = vmatpush2.msra.mxu0 0.0
        %1460 = vmatprep.subr.mxu0 0.0
        %1461 = vmatpush2.msra.mxu0 0.0
        %1462 = vmatprep.subr.mxu0 0.0
        %1463 = vmatpush2.msra.mxu0 0.0
        %1464 = vmatprep.subr.mxu0 0.0
        %1465 = vmatpush2.msra.mxu0 0.0
        %1466 = vmatprep.subr.mxu0 0.0
        %1467 = vmatpush2.msra.mxu0 0.0
        %1468 = vmatprep.subr.mxu0 0.0
        %1469 = vmatpush2.msra.mxu0 0.0
        %1470 = vmatprep.subr.mxu0 0.0
        %1471 = vmatpush2.msra.mxu0 0.0
        %1472 = vmatprep.subr.mxu0 0.0
        %1473 = vmatpush2.msra.mxu0 0.0
        %1474 = vmatprep.mubr.f32.mxu0 0.0
        %v1475 = vand.u32 %v887, 4294901760
        %1476 = vmatmul.mubr.f32.gmra.mxu0 %v1475
        %v1477 = vpop.f32.mrf.mxu0
        %v1478 = vadd.f32 %v1386, %v1477
        %v1479 = vpop.f32.mrf.mxu0
        %1480 = vmatprep.mubr.f32.mxu0 0.0
        %v1481 = vand.u32 %v890, 4294901760
        %1482 = vmatmul.mubr.f32.gmra.mxu0 %v1481
        %v1483 = vpop.f32.mrf.mxu0
        %v1484 = vadd.f32 %v1392, %v1483
        %v1485 = vpop.f32.mrf.mxu0
        %1486 = vmatprep.mubr.f32.mxu0 0.0
        %v1487 = vand.u32 %v893, 4294901760
        %1488 = vmatmul.mubr.f32.gmra.mxu0 %v1487
        %v1489 = vpop.f32.mrf.mxu0
        %v1490 = vadd.f32 %v1398, %v1489
        %v1491 = vpop.f32.mrf.mxu0
        %1492 = vmatprep.mubr.f32.mxu0 0.0
        %v1493 = vand.u32 %v896, 4294901760
        %1494 = vmatmul.mubr.f32.gmra.mxu0 %v1493
        %v1495 = vpop.f32.mrf.mxu0
        %v1496 = vadd.f32 %v1404, %v1495
        %v1497 = vpop.f32.mrf.mxu0
        %1498 = vdwg.mxu0
        %1503 = vrot.lane.b32.xlu0 %v1478, 32
        %v1504 = vpop.permute.xlu0 %1503
        %1505 = vrot.lane.b32.xlu0 %v1484, 32
        %v1506 = vpop.permute.xlu0 %1505
        %1507 = vrot.lane.b32.xlu0 %v1490, 32
        %v1508 = vpop.permute.xlu0 %1507
        %1509 = vrot.lane.b32.xlu0 %v1496, 32
        %v1510 = vpop.permute.xlu0 %1509
        %vm1515 = vcmask 261120
        %v1516 = vsel %vm1515, %v864, %v1504
        %v1517 = vsel %vm1515, %v870, %v1506
        %v1518 = vsel %vm1515, %v876, %v1508
        %v1519 = vsel %vm1515, %v882, %v1510
        %vm1520 = vcmask 785408
        %1521 = vst.msk [vmem:[%s207] sm:$0xff] %vm1520, %v1516
        %1522 = vst.msk [vmem:[%s207 + $0x8] sm:$0xff] %vm1520, %v1517
        %1523 = vst.msk [vmem:[%s207 + $0x10] sm:$0xff] %vm1520, %v1518
        %1524 = vst.msk [vmem:[%s207 + $0x18] sm:$0xff] %vm1520, %v1519
        %s1525 = sand.u32 %s120, 1
        %s1526 = scalar_lea.sflag [#allocation3], %s1525
        %s1527 = sand.u32 %s120, 1
        %s1528 = smul.addr %s1527, 32
        %s1529 = scalar_lea.vmem [#allocation2], %s1528
        // Predicated region
        $region37: #{tpu_custom_call.1} parent=35 // pred_check
          %p1530 = pneg %p130
        $region38: #{tpu_custom_call.1} parent=35 // pred_check_branch
          %1532 = sbr.rel (%p1530) target = $region40
        $region39: #{tpu_custom_call.1} parent=35 // pred_region
          %s1533 = smul.u32 4, %s18
          %s1535 = ssub.s32 512, 512
          %1536 = vsyncadd %s1526, %s1535
          %s1537 = smul.addr %s1533, 128
          %s1538 = scalar_lea.hbm %s4, %s1537
          %s1539 = sshll.u32 %s1529, 4
          %s1540 = int_to_ptr.vmem [resolvable:$true] %s1539
          %1545 = dma.vmem_to_hbm [thread:$0]  %s1540, 512, %s1538, %s1526, 128, 128, 8
        $region40: #{tpu_custom_call.1} parent=35 // pred_fallthru
          _
      $region36: #{tpu_custom_call.1} parent=5 // pred_fallthru
        _
      %p1546 = scmp.le.s32.totalorder 2, %s13
      // Predicated region
      $region41: #{tpu_custom_call.1} parent=5 // pred_check
        %p1547 = pneg %p1546
      $region42: #{tpu_custom_call.1} parent=5 // pred_check_branch
        %1549 = sbr.rel (%p1547) target = $region44
      $region43: #{tpu_custom_call.1} parent=5 // pred_region
        %s1550 = ssub.s32 %s13, 2
        // Predicated region
        $region45: #{tpu_custom_call.1} parent=43 // pred_check
          %p1551 = pneg %p136
        $region46: #{tpu_custom_call.1} parent=43 // pred_check_branch
          %1553 = sbr.rel (%p1551) target = $region48
        $region47: #{tpu_custom_call.1} parent=43 // pred_region
          %s1554 = sand.u32 %s121, 1
          %s1555 = scalar_lea.sflag [#allocation3], %s1554
          %s1556 = sand.u32 %s121, 1
          %s1557 = smul.addr %s1556, 32
          %s1558 = scalar_lea.vmem [#allocation2], %s1557
          %1559 = dma.done %s1555, 512
        $region48: #{tpu_custom_call.1} parent=43 // pred_fallthru
          _
      $region44: #{tpu_custom_call.1} parent=5 // pred_fallthru
        _
    $region6: #{tpu_custom_call.1} parent=1 // loop_footer
      %s17 = sadd.s32 1, %s13
    $region7: #{tpu_custom_call.1} parent=1 // loop_footer_branch
      %12 = sbr.rel target = $region3
    $region8: #{tpu_custom_call.1} parent=1 // loop_exit
      _
    %1560 = vsyncpa [#allocation3], 1
    %s1561 = scalar_lea.sflag [#allocation3], 1
    %1562 = vsyncpa %s1561, 1

</llo_original>
